<compile_context>
chip_gen: v7x
topology: tpu7x:2x2x1
jax: 0.10.0
libtpu: 0.0.40
codegen_flags: <defaults>
</compile_context>

<pallas_src>
import functools
import math

import jax
import jax.numpy as jnp
from jax.experimental import pallas as pl
from jax.experimental.pallas import tpu as pltpu


# ---------------------------------------------------------------------------
# Mosaic-safe erf / erf-based GELU (matches torch.nn.functional.gelu default)
# ---------------------------------------------------------------------------
_SQRT1_2 = 0.7071067811865476


def _erf_approx(z):
    # Abramowitz & Stegun 7.1.26, max abs error ~1.5e-7.  Uses only exp/mul/add/where.
    a1, a2, a3, a4, a5 = 0.254829592, -0.284496736, 1.421413741, -1.453152027, 1.061405429
    pc = 0.3275911
    za = jnp.abs(z)
    t = 1.0 / (1.0 + pc * za)
    poly = ((((a5 * t + a4) * t + a3) * t + a2) * t + a1) * t
    e = 1.0 - poly * jnp.exp(-za * za)
    return jnp.where(z < 0, -e, e)


def _gelu_erf(x):
    return 0.5 * x * (1.0 + _erf_approx(x * _SQRT1_2))


# ---------------------------------------------------------------------------
# Fused Linear_Block kernel: one grid step == one batch element, all heads.
# ---------------------------------------------------------------------------
def _linear_block_kernel(
    x_ref, ln1g_ref, ln1b_ref, win_ref, bin_ref, wa_ref,
    wout_ref, bout_ref, ln2g_ref, ln2b_ref, w1_ref, b1_ref, w2_ref, b2_ref,
    out_ref, attn_ref, *, num_heads, eps, scale,
):
    f32 = jnp.float32
    x_in = x_ref[0].astype(f32)                       # (S, E) original inputs
    S, E = x_in.shape
    H = num_heads
    D = E // H

    def layernorm(v, g_ref, b_ref):
        mu = jnp.mean(v, axis=-1, keepdims=True)
        dv = v - mu
        var = jnp.mean(dv * dv, axis=-1, keepdims=True)
        return dv * jax.lax.rsqrt(var + eps) * g_ref[...] + b_ref[...]

    def softmax_last(v):
        m = jnp.max(v, axis=-1, keepdims=True)
        e = jnp.exp(v - m)
        return e * pl.reciprocal(jnp.sum(e, axis=-1, keepdims=True), approx=True)

    # --- ln_1 ---
    x = layernorm(x_in, ln1g_ref, ln1b_ref)

    # --- in_project (lane-dense (S,E) @ (E,E) on the MXU, default precision) ---
    x = jnp.dot(x, win_ref[...], preferred_element_type=f32) + bin_ref[...]   # (S, E)

    # --- pseudo-MHSA: per-head (head count is small & static -> unrolled) ---
    head_outs = []
    for h in range(H):
        # head slice + softmax over head_dim (the `self.ln(x)` call)
        xh = softmax_last(x[:, h * D:(h + 1) * D])                            # (S, D)

        # einsum('bnse,oneh,bnrh->bnso') restructured with bounded footprint:
        #   xs[d]    = sum_r xh[r, d]
        #   M[e, o]  = sum_d W[o, h, e, d] * xs[d]      (wa_ref laid out (H, D_e, O, D_h))
        #   attn[s,o]= sum_e xh[s, e] * M[e, o]  * scale
        xs = jnp.sum(xh, axis=0, keepdims=True)                               # (1, D)
        m_h = jnp.sum(wa_ref[h] * xs.reshape(1, 1, D), axis=-1)               # (D_e, O)
        attn_raw = jnp.dot(xh, m_h, preferred_element_type=f32) * scale       # (S, O)

        p = softmax_last(attn_raw)                   # attn_weights_1 (pre-dropout)
        attn_ref[0, h] = p.astype(attn_ref.dtype)

        # attn_dropout = identity (eval); attn_outputs = attn @ x   (O == S)
        head_outs.append(jnp.dot(p, xh, preferred_element_type=f32))          # (S, D)

    ao = jnp.concatenate(head_outs, axis=-1)                                  # (S, E)

    # --- out_project + residual with ORIGINAL inputs ---
    ao = jnp.dot(ao, wout_ref[...], preferred_element_type=f32) + bout_ref[...]
    xres = ao + x_in                                                          # (S, E)

    # --- ln_2 + MLP (Linear -> GELU(erf) -> Linear) + residual ---
    y = layernorm(xres, ln2g_ref, ln2b_ref)
    y = jnp.dot(y, w1_ref[...], preferred_element_type=f32) + b1_ref[...]
    y = _gelu_erf(y)
    y = jnp.dot(y, w2_ref[...], preferred_element_type=f32) + b2_ref[...]

    out_ref[0] = (y + xres).astype(out_ref.dtype)


def linear_block_forward(inputs, params, *, num_heads, eps=1e-5):
    """Fused Linear_Block forward.  Returns (output, attn_probs)."""
    B, S, E = inputs.shape
    H = num_heads
    D = E // H
    O = params["attn_weight"].shape[0]                 # hidden_feature
    assert O == S, "torch.matmul(attn_weights, x) requires hidden_feature == seq_len"
    M = params["w1"].shape[1]

    # One-time weight layout prep (XLA, outside the kernel):
    # attn_weight (O, H, D_e, D_h) -> (H, D_e, O, D_h) for head-major in-kernel slicing.
    wa = jnp.transpose(params["attn_weight"], (1, 2, 0, 3))

    kern = functools.partial(
        _linear_block_kernel,
        num_heads=H, eps=float(eps), scale=1.0 / (D * math.sqrt(S)),
    )

    rep2 = lambda b: (0, 0)
    grid_spec = pltpu.PrefetchScalarGridSpec(
        num_scalar_prefetch=0,
        grid=(B,),
        in_specs=[
            pl.BlockSpec((1, S, E), lambda b: (b, 0, 0)),        # inputs
            pl.BlockSpec((1, E), rep2), pl.BlockSpec((1, E), rep2),   # ln_1 gamma, beta
            pl.BlockSpec((E, E), rep2), pl.BlockSpec((1, E), rep2),   # in_project  W, b
            pl.BlockSpec((H, D, O, D), lambda b: (0, 0, 0, 0)),       # attn_weight (head-major)
            pl.BlockSpec((E, E), rep2), pl.BlockSpec((1, E), rep2),   # out_project W, b
            pl.BlockSpec((1, E), rep2), pl.BlockSpec((1, E), rep2),   # ln_2 gamma, beta
            pl.BlockSpec((E, M), rep2), pl.BlockSpec((1, M), rep2),   # mlp.linear1 W, b
            pl.BlockSpec((M, E), rep2), pl.BlockSpec((1, E), rep2),   # mlp.linear2 W, b
        ],
        out_specs=(
            pl.BlockSpec((1, S, E), lambda b: (b, 0, 0)),             # block output
            pl.BlockSpec((1, H, S, O), lambda b: (b, 0, 0, 0)),       # attn_probs
        ),
    )
    out_shape = (
        jax.ShapeDtypeStruct((B, S, E), jnp.float32),
        jax.ShapeDtypeStruct((B, H, S, O), jnp.float32),
    )
    return pl.pallas_call(
        kern,
        out_shape=out_shape,
        grid_spec=grid_spec,
        compiler_params=pltpu.CompilerParams(dimension_semantics=("parallel",)),
    )(
        inputs,
        params["ln1_g"].reshape(1, E), params["ln1_b"].reshape(1, E),
        params["w_in"], params["b_in"].reshape(1, E),
        wa,
        params["w_out"], params["b_out"].reshape(1, E),
        params["ln2_g"].reshape(1, E), params["ln2_b"].reshape(1, E),
        params["w1"], params["b1"].reshape(1, M),
        params["w2"], params["b2"].reshape(1, E),
    )


# ---------------------------------------------------------------------------
# Pure-JAX reference (mirrors the PyTorch forward, eval-mode dropout)
# ---------------------------------------------------------------------------
def reference_forward(inputs, params, *, num_heads, eps=1e-5):
    B, S, E = inputs.shape
    H = num_heads
    D = E // H

    def ln(v, g, b):
        mu = v.mean(-1, keepdims=True)
        var = ((v - mu) ** 2).mean(-1, keepdims=True)
        return (v - mu) / jnp.sqrt(var + eps) * g + b

    x0 = ln(inputs, params["ln1_g"], params["ln1_b"])                     # ln_1
    x = jnp.dot(x0, params["w_in"]) + params["b_in"]                      # in_project
    x = x.reshape(B, S, H, D).transpose(0, 2, 1, 3)                       # (B, H, S, D)
    x = jax.nn.softmax(x, axis=-1)                                        # self.ln(x)
    attn = jnp.einsum("bnse,oneh,bnrh->bnso", x, params["attn_weight"], x)
    attn = attn / (D * math.sqrt(S))
    attn_1 = jax.nn.softmax(attn, axis=-1)                                # attn_weights_1
    attn_out = jnp.matmul(attn_1, x)                                      # dropout = identity
    attn_out = attn_out.transpose(0, 2, 1, 3).reshape(B, S, E)
    attn_out = jnp.dot(attn_out, params["w_out"]) + params["b_out"]       # out_project
    xres = attn_out + inputs                                              # residual 1
    y = ln(xres, params["ln2_g"], params["ln2_b"])                        # ln_2
    y = _gelu_erf(jnp.dot(y, params["w1"]) + params["b1"])                # mlp
    y = jnp.dot(y, params["w2"]) + params["b2"]
    return y + xres, attn_1


if __name__ == "__main__":
    # model_dim=32, num_heads=4 (head_dim=8), mlp_dim=64, seq=8, batch=2,
    # hidden_feature = seq_len (required by torch.matmul(attn_weights, x)).
    B, S, E, H, MLP = 2, 8, 32, 4, 64
    D = E // H
    O = S

    key = jax.random.PRNGKey(0)
    ks = jax.random.split(key, 12)
    inputs = jax.random.normal(ks[0], (B, S, E), jnp.float32)

    # Synthetic parameters (linear weights stored as (in, out); y = x @ W + b).
    params = {
        "ln1_g": 1.0 + 0.1 * jax.random.normal(ks[1], (E,), jnp.float32),
        "ln1_b": 0.05 * jax.random.normal(ks[2], (E,), jnp.float32),
        "w_in": jax.random.normal(ks[3], (E, E), jnp.float32) / math.sqrt(E),
        "b_in": 0.02 * jax.random.normal(ks[4], (E,), jnp.float32),
        "attn_weight": 0.3 * jax.random.normal(ks[5], (O, H, D, D), jnp.float32),
        "w_out": jax.random.normal(ks[6], (E, E), jnp.float32) / math.sqrt(E),
        "b_out": 0.02 * jax.random.normal(ks[7], (E,), jnp.float32),
        "ln2_g": 1.0 + 0.1 * jax.random.normal(ks[8], (E,), jnp.float32),
        "ln2_b": 0.05 * jax.random.normal(ks[9], (E,), jnp.float32),
        "w1": jax.random.normal(ks[10], (E, MLP), jnp.float32) * math.sqrt(2.0 / (E + MLP)),
        "b1": 1e-6 * jnp.ones((MLP,), jnp.float32),
        "w2": jax.random.normal(ks[11], (MLP, E), jnp.float32) * math.sqrt(2.0 / (E + MLP)),
        "b2": 1e-6 * jnp.ones((E,), jnp.float32),
    }

    fwd = jax.jit(functools.partial(linear_block_forward, num_heads=H))
    out, attn = jax.block_until_ready(fwd(inputs, params))

    ref_out, ref_attn = reference_forward(inputs, params, num_heads=H)

    assert out.shape == (B, S, E) and attn.shape == (B, H, S, O)
    # Tolerances account for default (bf16-pass) MXU precision in the kernel vs the
    # XLA reference and the approx-reciprocal softmax; semantic bugs would be O(0.1-1).
    assert jnp.allclose(attn, ref_attn, atol=2e-3, rtol=2e-3), "attn_probs mismatch"
    assert jnp.allclose(out, ref_out, atol=2e-2, rtol=2e-2), "output mismatch"
    print("KERNEL_OK")
</pallas_src>

<mosaic_0001>
module attributes {stable_mosaic.version = 11 : i64} {
  func.func @_linear_block_kernel(%arg0: i32, %arg1: memref<1x8x32xf32, #tpu.memory_space<vmem>>, %arg2: memref<1x32xf32, #tpu.memory_space<vmem>>, %arg3: memref<1x32xf32, #tpu.memory_space<vmem>>, %arg4: memref<32x32xf32, #tpu.memory_space<vmem>>, %arg5: memref<1x32xf32, #tpu.memory_space<vmem>>, %arg6: memref<4x8x8x8xf32, #tpu.memory_space<vmem>>, %arg7: memref<32x32xf32, #tpu.memory_space<vmem>>, %arg8: memref<1x32xf32, #tpu.memory_space<vmem>>, %arg9: memref<1x32xf32, #tpu.memory_space<vmem>>, %arg10: memref<1x32xf32, #tpu.memory_space<vmem>>, %arg11: memref<32x64xf32, #tpu.memory_space<vmem>>, %arg12: memref<1x64xf32, #tpu.memory_space<vmem>>, %arg13: memref<64x32xf32, #tpu.memory_space<vmem>>, %arg14: memref<1x32xf32, #tpu.memory_space<vmem>>, %arg15: memref<1x8x32xf32, #tpu.memory_space<vmem>>, %arg16: memref<1x4x8x8xf32, #tpu.memory_space<vmem>>) attributes {dimension_semantics = [#tpu.dimension_semantics<parallel>], iteration_bounds = array<i64: 2>, scalar_prefetch = 0 : i64, scratch_operands = 0 : i64, tpu.core_type = #tpu.core_type<tc>, window_params = [{transform_indices = @transform_0, window_bounds = array<i64: 1, 8, 32>}, {pipeline_mode = #tpu.pipeline_mode<synchronous>, transform_indices = @transform_1, window_bounds = array<i64: 1, 32>}, {pipeline_mode = #tpu.pipeline_mode<synchronous>, transform_indices = @transform_2, window_bounds = array<i64: 1, 32>}, {pipeline_mode = #tpu.pipeline_mode<synchronous>, transform_indices = @transform_3, window_bounds = array<i64: 32, 32>}, {pipeline_mode = #tpu.pipeline_mode<synchronous>, transform_indices = @transform_4, window_bounds = array<i64: 1, 32>}, {pipeline_mode = #tpu.pipeline_mode<synchronous>, transform_indices = @transform_5, window_bounds = array<i64: 4, 8, 8, 8>}, {pipeline_mode = #tpu.pipeline_mode<synchronous>, transform_indices = @transform_6, window_bounds = array<i64: 32, 32>}, {pipeline_mode = #tpu.pipeline_mode<synchronous>, transform_indices = @transform_7, window_bounds = array<i64: 1, 32>}, {pipeline_mode = #tpu.pipeline_mode<synchronous>, transform_indices = @transform_8, window_bounds = array<i64: 1, 32>}, {pipeline_mode = #tpu.pipeline_mode<synchronous>, transform_indices = @transform_9, window_bounds = array<i64: 1, 32>}, {pipeline_mode = #tpu.pipeline_mode<synchronous>, transform_indices = @transform_10, window_bounds = array<i64: 32, 64>}, {pipeline_mode = #tpu.pipeline_mode<synchronous>, transform_indices = @transform_11, window_bounds = array<i64: 1, 64>}, {pipeline_mode = #tpu.pipeline_mode<synchronous>, transform_indices = @transform_12, window_bounds = array<i64: 64, 32>}, {pipeline_mode = #tpu.pipeline_mode<synchronous>, transform_indices = @transform_13, window_bounds = array<i64: 1, 32>}, {transform_indices = @transform_14, window_bounds = array<i64: 1, 8, 32>}, {transform_indices = @transform_15, window_bounds = array<i64: 1, 4, 8, 8>}]} {
    %c0 = arith.constant 0 : index
    %c0_0 = arith.constant 0 : index
    %c0_1 = arith.constant 0 : index
    %0 = vector.load %arg1[%c0, %c0_0, %c0_1] : memref<1x8x32xf32, #tpu.memory_space<vmem>>, vector<1x8x32xf32>
    %1 = vector.shape_cast %0 : vector<1x8x32xf32> to vector<8x32xf32>
    %cst = arith.constant dense<0.000000e+00> : vector<8xf32>
    %2 = vector.multi_reduction <add>, %1, %cst [1] : vector<8x32xf32> to vector<8xf32>
    %3 = vector.shape_cast %2 : vector<8xf32> to vector<8x1xf32>
    %cst_2 = arith.constant 3.200000e+01 : f32
    %4 = vector.broadcast %cst_2 : f32 to vector<8x1xf32>
    %5 = arith.divf %3, %4 : vector<8x1xf32>
    %6 = vector.broadcast %5 : vector<8x1xf32> to vector<8x32xf32>
    %7 = arith.subf %1, %6 : vector<8x32xf32>
    %8 = arith.mulf %7, %7 : vector<8x32xf32>
    %cst_3 = arith.constant dense<0.000000e+00> : vector<8xf32>
    %9 = vector.multi_reduction <add>, %8, %cst_3 [1] : vector<8x32xf32> to vector<8xf32>
    %10 = vector.shape_cast %9 : vector<8xf32> to vector<8x1xf32>
    %cst_4 = arith.constant 3.200000e+01 : f32
    %11 = vector.broadcast %cst_4 : f32 to vector<8x1xf32>
    %12 = arith.divf %10, %11 : vector<8x1xf32>
    %cst_5 = arith.constant 9.99999974E-6 : f32
    %13 = vector.broadcast %cst_5 : f32 to vector<8x1xf32>
    %14 = arith.addf %12, %13 : vector<8x1xf32>
    %15 = math.rsqrt %14 : vector<8x1xf32>
    %16 = vector.broadcast %15 : vector<8x1xf32> to vector<8x32xf32>
    %17 = arith.mulf %7, %16 : vector<8x32xf32>
    %c0_6 = arith.constant 0 : index
    %c0_7 = arith.constant 0 : index
    %18 = vector.load %arg2[%c0_6, %c0_7] : memref<1x32xf32, #tpu.memory_space<vmem>>, vector<1x32xf32>
    %19 = vector.broadcast %18 : vector<1x32xf32> to vector<8x32xf32>
    %20 = arith.mulf %17, %19 : vector<8x32xf32>
    %c0_8 = arith.constant 0 : index
    %c0_9 = arith.constant 0 : index
    %21 = vector.load %arg3[%c0_8, %c0_9] : memref<1x32xf32, #tpu.memory_space<vmem>>, vector<1x32xf32>
    %22 = vector.broadcast %21 : vector<1x32xf32> to vector<8x32xf32>
    %23 = arith.addf %20, %22 : vector<8x32xf32>
    %c0_10 = arith.constant 0 : index
    %c0_11 = arith.constant 0 : index
    %24 = vector.load %arg4[%c0_10, %c0_11] : memref<32x32xf32, #tpu.memory_space<vmem>>, vector<32x32xf32>
    %cst_12 = arith.constant dense<0.000000e+00> : vector<8x32xf32>
    %25 = tpu.matmul %23, %24, %cst_12 {dimension_numbers = #tpu.dot_dimension_numbers<[1], [0], [0], [1], [0, 0, 1, 1], [], []>} : vector<8x32xf32>, vector<32x32xf32>, vector<8x32xf32> -> vector<8x32xf32>
    %c0_13 = arith.constant 0 : index
    %c0_14 = arith.constant 0 : index
    %26 = vector.load %arg5[%c0_13, %c0_14] : memref<1x32xf32, #tpu.memory_space<vmem>>, vector<1x32xf32>
    %27 = vector.broadcast %26 : vector<1x32xf32> to vector<8x32xf32>
    %28 = arith.addf %25, %27 : vector<8x32xf32>
    %29 = vector.extract_strided_slice %28 {offsets = [0, 0], sizes = [8, 8], strides = [1, 1]} : vector<8x32xf32> to vector<8x8xf32>
    %cst_15 = arith.constant dense<0xFF800000> : vector<8xf32>
    %30 = vector.multi_reduction <maximumf>, %29, %cst_15 [1] : vector<8x8xf32> to vector<8xf32>
    %31 = vector.shape_cast %30 : vector<8xf32> to vector<8x1xf32>
    %32 = vector.broadcast %31 : vector<8x1xf32> to vector<8x8xf32>
    %33 = arith.subf %29, %32 : vector<8x8xf32>
    %34 = math.exp %33 : vector<8x8xf32>
    %cst_16 = arith.constant dense<0.000000e+00> : vector<8xf32>
    %35 = vector.multi_reduction <add>, %34, %cst_16 [1] : vector<8x8xf32> to vector<8xf32>
    %36 = vector.shape_cast %35 : vector<8xf32> to vector<8x1xf32>
    %37 = tpu.reciprocal %36 {approx = true} : vector<8x1xf32> -> vector<8x1xf32>
    %38 = vector.broadcast %37 : vector<8x1xf32> to vector<8x8xf32>
    %39 = arith.mulf %34, %38 : vector<8x8xf32>
    %cst_17 = arith.constant dense<0.000000e+00> : vector<8xf32>
    %40 = vector.multi_reduction <add>, %39, %cst_17 [0] : vector<8x8xf32> to vector<8xf32>
    %41 = vector.shape_cast %40 : vector<8xf32> to vector<1x8xf32>
    %c0_18 = arith.constant 0 : index
    %c0_19 = arith.constant 0 : index
    %c0_20 = arith.constant 0 : index
    %c0_21 = arith.constant 0 : index
    %42 = vector.load %arg6[%c0_18, %c0_19, %c0_20, %c0_21] : memref<4x8x8x8xf32, #tpu.memory_space<vmem>>, vector<1x8x8x8xf32>
    %43 = vector.shape_cast %42 : vector<1x8x8x8xf32> to vector<8x8x8xf32>
    %44 = vector.shape_cast %41 : vector<1x8xf32> to vector<1x1x8xf32>
    %45 = vector.broadcast %44 : vector<1x1x8xf32> to vector<8x8x8xf32>
    %46 = arith.mulf %43, %45 : vector<8x8x8xf32>
    %cst_22 = arith.constant dense<0.000000e+00> : vector<8x8xf32>
    %47 = vector.multi_reduction <add>, %46, %cst_22 [2] : vector<8x8x8xf32> to vector<8x8xf32>
    %cst_23 = arith.constant dense<0.000000e+00> : vector<8x8xf32>
    %48 = tpu.matmul %39, %47, %cst_23 {dimension_numbers = #tpu.dot_dimension_numbers<[1], [0], [0], [1], [0, 0, 1, 1], [], []>} : vector<8x8xf32>, vector<8x8xf32>, vector<8x8xf32> -> vector<8x8xf32>
    %cst_24 = arith.constant 0.0441941731 : f32
    %49 = vector.broadcast %cst_24 : f32 to vector<8x8xf32>
    %50 = arith.mulf %48, %49 : vector<8x8xf32>
    %cst_25 = arith.constant dense<0xFF800000> : vector<8xf32>
    %51 = vector.multi_reduction <maximumf>, %50, %cst_25 [1] : vector<8x8xf32> to vector<8xf32>
    %52 = vector.shape_cast %51 : vector<8xf32> to vector<8x1xf32>
    %53 = vector.broadcast %52 : vector<8x1xf32> to vector<8x8xf32>
    %54 = arith.subf %50, %53 : vector<8x8xf32>
    %55 = math.exp %54 : vector<8x8xf32>
    %cst_26 = arith.constant dense<0.000000e+00> : vector<8xf32>
    %56 = vector.multi_reduction <add>, %55, %cst_26 [1] : vector<8x8xf32> to vector<8xf32>
    %57 = vector.shape_cast %56 : vector<8xf32> to vector<8x1xf32>
    %58 = tpu.reciprocal %57 {approx = true} : vector<8x1xf32> -> vector<8x1xf32>
    %59 = vector.broadcast %58 : vector<8x1xf32> to vector<8x8xf32>
    %60 = arith.mulf %55, %59 : vector<8x8xf32>
    %c0_27 = arith.constant 0 : index
    %c0_28 = arith.constant 0 : index
    %c0_29 = arith.constant 0 : index
    %c0_30 = arith.constant 0 : index
    %61 = vector.load %arg16[%c0_27, %c0_28, %c0_29, %c0_30] : memref<1x4x8x8xf32, #tpu.memory_space<vmem>>, vector<1x1x8x8xf32>
    %62 = vector.shape_cast %61 : vector<1x1x8x8xf32> to vector<8x8xf32>
    %63 = vector.shape_cast %60 : vector<8x8xf32> to vector<1x1x8x8xf32>
    tpu.vector_store %arg16[%c0_27, %c0_28, %c0_29, %c0_30], %63 {strides = array<i32>} : memref<1x4x8x8xf32, #tpu.memory_space<vmem>>, vector<1x1x8x8xf32>,
    %cst_31 = arith.constant dense<0.000000e+00> : vector<8x8xf32>
    %64 = tpu.matmul %60, %39, %cst_31 {dimension_numbers = #tpu.dot_dimension_numbers<[1], [0], [0], [1], [0, 0, 1, 1], [], []>} : vector<8x8xf32>, vector<8x8xf32>, vector<8x8xf32> -> vector<8x8xf32>
    %65 = vector.extract_strided_slice %28 {offsets = [0, 8], sizes = [8, 8], strides = [1, 1]} : vector<8x32xf32> to vector<8x8xf32>
    %cst_32 = arith.constant dense<0xFF800000> : vector<8xf32>
    %66 = vector.multi_reduction <maximumf>, %65, %cst_32 [1] : vector<8x8xf32> to vector<8xf32>
    %67 = vector.shape_cast %66 : vector<8xf32> to vector<8x1xf32>
    %68 = vector.broadcast %67 : vector<8x1xf32> to vector<8x8xf32>
    %69 = arith.subf %65, %68 : vector<8x8xf32>
    %70 = math.exp %69 : vector<8x8xf32>
    %cst_33 = arith.constant dense<0.000000e+00> : vector<8xf32>
    %71 = vector.multi_reduction <add>, %70, %cst_33 [1] : vector<8x8xf32> to vector<8xf32>
    %72 = vector.shape_cast %71 : vector<8xf32> to vector<8x1xf32>
    %73 = tpu.reciprocal %72 {approx = true} : vector<8x1xf32> -> vector<8x1xf32>
    %74 = vector.broadcast %73 : vector<8x1xf32> to vector<8x8xf32>
    %75 = arith.mulf %70, %74 : vector<8x8xf32>
    %cst_34 = arith.constant dense<0.000000e+00> : vector<8xf32>
    %76 = vector.multi_reduction <add>, %75, %cst_34 [0] : vector<8x8xf32> to vector<8xf32>
    %77 = vector.shape_cast %76 : vector<8xf32> to vector<1x8xf32>
    %c1 = arith.constant 1 : index
    %c0_35 = arith.constant 0 : index
    %c0_36 = arith.constant 0 : index
    %c0_37 = arith.constant 0 : index
    %78 = vector.load %arg6[%c1, %c0_35, %c0_36, %c0_37] : memref<4x8x8x8xf32, #tpu.memory_space<vmem>>, vector<1x8x8x8xf32>
    %79 = vector.shape_cast %78 : vector<1x8x8x8xf32> to vector<8x8x8xf32>
    %80 = vector.shape_cast %77 : vector<1x8xf32> to vector<1x1x8xf32>
    %81 = vector.broadcast %80 : vector<1x1x8xf32> to vector<8x8x8xf32>
    %82 = arith.mulf %79, %81 : vector<8x8x8xf32>
    %cst_38 = arith.constant dense<0.000000e+00> : vector<8x8xf32>
    %83 = vector.multi_reduction <add>, %82, %cst_38 [2] : vector<8x8x8xf32> to vector<8x8xf32>
    %cst_39 = arith.constant dense<0.000000e+00> : vector<8x8xf32>
    %84 = tpu.matmul %75, %83, %cst_39 {dimension_numbers = #tpu.dot_dimension_numbers<[1], [0], [0], [1], [0, 0, 1, 1], [], []>} : vector<8x8xf32>, vector<8x8xf32>, vector<8x8xf32> -> vector<8x8xf32>
    %cst_40 = arith.constant 0.0441941731 : f32
    %85 = vector.broadcast %cst_40 : f32 to vector<8x8xf32>
    %86 = arith.mulf %84, %85 : vector<8x8xf32>
    %cst_41 = arith.constant dense<0xFF800000> : vector<8xf32>
    %87 = vector.multi_reduction <maximumf>, %86, %cst_41 [1] : vector<8x8xf32> to vector<8xf32>
    %88 = vector.shape_cast %87 : vector<8xf32> to vector<8x1xf32>
    %89 = vector.broadcast %88 : vector<8x1xf32> to vector<8x8xf32>
    %90 = arith.subf %86, %89 : vector<8x8xf32>
    %91 = math.exp %90 : vector<8x8xf32>
    %cst_42 = arith.constant dense<0.000000e+00> : vector<8xf32>
    %92 = vector.multi_reduction <add>, %91, %cst_42 [1] : vector<8x8xf32> to vector<8xf32>
    %93 = vector.shape_cast %92 : vector<8xf32> to vector<8x1xf32>
    %94 = tpu.reciprocal %93 {approx = true} : vector<8x1xf32> -> vector<8x1xf32>
    %95 = vector.broadcast %94 : vector<8x1xf32> to vector<8x8xf32>
    %96 = arith.mulf %91, %95 : vector<8x8xf32>
    %c0_43 = arith.constant 0 : index
    %c1_44 = arith.constant 1 : index
    %c0_45 = arith.constant 0 : index
    %c0_46 = arith.constant 0 : index
    %97 = vector.load %arg16[%c0_43, %c1_44, %c0_45, %c0_46] : memref<1x4x8x8xf32, #tpu.memory_space<vmem>>, vector<1x1x8x8xf32>
    %98 = vector.shape_cast %97 : vector<1x1x8x8xf32> to vector<8x8xf32>
    %99 = vector.shape_cast %96 : vector<8x8xf32> to vector<1x1x8x8xf32>
    tpu.vector_store %arg16[%c0_43, %c1_44, %c0_45, %c0_46], %99 {strides = array<i32>} : memref<1x4x8x8xf32, #tpu.memory_space<vmem>>, vector<1x1x8x8xf32>,
    %cst_47 = arith.constant dense<0.000000e+00> : vector<8x8xf32>
    %100 = tpu.matmul %96, %75, %cst_47 {dimension_numbers = #tpu.dot_dimension_numbers<[1], [0], [0], [1], [0, 0, 1, 1], [], []>} : vector<8x8xf32>, vector<8x8xf32>, vector<8x8xf32> -> vector<8x8xf32>
    %101 = vector.extract_strided_slice %28 {offsets = [0, 16], sizes = [8, 8], strides = [1, 1]} : vector<8x32xf32> to vector<8x8xf32>
    %cst_48 = arith.constant dense<0xFF800000> : vector<8xf32>
    %102 = vector.multi_reduction <maximumf>, %101, %cst_48 [1] : vector<8x8xf32> to vector<8xf32>
    %103 = vector.shape_cast %102 : vector<8xf32> to vector<8x1xf32>
    %104 = vector.broadcast %103 : vector<8x1xf32> to vector<8x8xf32>
    %105 = arith.subf %101, %104 : vector<8x8xf32>
    %106 = math.exp %105 : vector<8x8xf32>
    %cst_49 = arith.constant dense<0.000000e+00> : vector<8xf32>
    %107 = vector.multi_reduction <add>, %106, %cst_49 [1] : vector<8x8xf32> to vector<8xf32>
    %108 = vector.shape_cast %107 : vector<8xf32> to vector<8x1xf32>
    %109 = tpu.reciprocal %108 {approx = true} : vector<8x1xf32> -> vector<8x1xf32>
    %110 = vector.broadcast %109 : vector<8x1xf32> to vector<8x8xf32>
    %111 = arith.mulf %106, %110 : vector<8x8xf32>
    %cst_50 = arith.constant dense<0.000000e+00> : vector<8xf32>
    %112 = vector.multi_reduction <add>, %111, %cst_50 [0] : vector<8x8xf32> to vector<8xf32>
    %113 = vector.shape_cast %112 : vector<8xf32> to vector<1x8xf32>
    %c2 = arith.constant 2 : index
    %c0_51 = arith.constant 0 : index
    %c0_52 = arith.constant 0 : index
    %c0_53 = arith.constant 0 : index
    %114 = vector.load %arg6[%c2, %c0_51, %c0_52, %c0_53] : memref<4x8x8x8xf32, #tpu.memory_space<vmem>>, vector<1x8x8x8xf32>
    %115 = vector.shape_cast %114 : vector<1x8x8x8xf32> to vector<8x8x8xf32>
    %116 = vector.shape_cast %113 : vector<1x8xf32> to vector<1x1x8xf32>
    %117 = vector.broadcast %116 : vector<1x1x8xf32> to vector<8x8x8xf32>
    %118 = arith.mulf %115, %117 : vector<8x8x8xf32>
    %cst_54 = arith.constant dense<0.000000e+00> : vector<8x8xf32>
    %119 = vector.multi_reduction <add>, %118, %cst_54 [2] : vector<8x8x8xf32> to vector<8x8xf32>
    %cst_55 = arith.constant dense<0.000000e+00> : vector<8x8xf32>
    %120 = tpu.matmul %111, %119, %cst_55 {dimension_numbers = #tpu.dot_dimension_numbers<[1], [0], [0], [1], [0, 0, 1, 1], [], []>} : vector<8x8xf32>, vector<8x8xf32>, vector<8x8xf32> -> vector<8x8xf32>
    %cst_56 = arith.constant 0.0441941731 : f32
    %121 = vector.broadcast %cst_56 : f32 to vector<8x8xf32>
    %122 = arith.mulf %120, %121 : vector<8x8xf32>
    %cst_57 = arith.constant dense<0xFF800000> : vector<8xf32>
    %123 = vector.multi_reduction <maximumf>, %122, %cst_57 [1] : vector<8x8xf32> to vector<8xf32>
    %124 = vector.shape_cast %123 : vector<8xf32> to vector<8x1xf32>
    %125 = vector.broadcast %124 : vector<8x1xf32> to vector<8x8xf32>
    %126 = arith.subf %122, %125 : vector<8x8xf32>
    %127 = math.exp %126 : vector<8x8xf32>
    %cst_58 = arith.constant dense<0.000000e+00> : vector<8xf32>
    %128 = vector.multi_reduction <add>, %127, %cst_58 [1] : vector<8x8xf32> to vector<8xf32>
    %129 = vector.shape_cast %128 : vector<8xf32> to vector<8x1xf32>
    %130 = tpu.reciprocal %129 {approx = true} : vector<8x1xf32> -> vector<8x1xf32>
    %131 = vector.broadcast %130 : vector<8x1xf32> to vector<8x8xf32>
    %132 = arith.mulf %127, %131 : vector<8x8xf32>
    %c0_59 = arith.constant 0 : index
    %c2_60 = arith.constant 2 : index
    %c0_61 = arith.constant 0 : index
    %c0_62 = arith.constant 0 : index
    %133 = vector.load %arg16[%c0_59, %c2_60, %c0_61, %c0_62] : memref<1x4x8x8xf32, #tpu.memory_space<vmem>>, vector<1x1x8x8xf32>
    %134 = vector.shape_cast %133 : vector<1x1x8x8xf32> to vector<8x8xf32>
    %135 = vector.shape_cast %132 : vector<8x8xf32> to vector<1x1x8x8xf32>
    tpu.vector_store %arg16[%c0_59, %c2_60, %c0_61, %c0_62], %135 {strides = array<i32>} : memref<1x4x8x8xf32, #tpu.memory_space<vmem>>, vector<1x1x8x8xf32>,
    %cst_63 = arith.constant dense<0.000000e+00> : vector<8x8xf32>
    %136 = tpu.matmul %132, %111, %cst_63 {dimension_numbers = #tpu.dot_dimension_numbers<[1], [0], [0], [1], [0, 0, 1, 1], [], []>} : vector<8x8xf32>, vector<8x8xf32>, vector<8x8xf32> -> vector<8x8xf32>
    %137 = vector.extract_strided_slice %28 {offsets = [0, 24], sizes = [8, 8], strides = [1, 1]} : vector<8x32xf32> to vector<8x8xf32>
    %cst_64 = arith.constant dense<0xFF800000> : vector<8xf32>
    %138 = vector.multi_reduction <maximumf>, %137, %cst_64 [1] : vector<8x8xf32> to vector<8xf32>
    %139 = vector.shape_cast %138 : vector<8xf32> to vector<8x1xf32>
    %140 = vector.broadcast %139 : vector<8x1xf32> to vector<8x8xf32>
    %141 = arith.subf %137, %140 : vector<8x8xf32>
    %142 = math.exp %141 : vector<8x8xf32>
    %cst_65 = arith.constant dense<0.000000e+00> : vector<8xf32>
    %143 = vector.multi_reduction <add>, %142, %cst_65 [1] : vector<8x8xf32> to vector<8xf32>
    %144 = vector.shape_cast %143 : vector<8xf32> to vector<8x1xf32>
    %145 = tpu.reciprocal %144 {approx = true} : vector<8x1xf32> -> vector<8x1xf32>
    %146 = vector.broadcast %145 : vector<8x1xf32> to vector<8x8xf32>
    %147 = arith.mulf %142, %146 : vector<8x8xf32>
    %cst_66 = arith.constant dense<0.000000e+00> : vector<8xf32>
    %148 = vector.multi_reduction <add>, %147, %cst_66 [0] : vector<8x8xf32> to vector<8xf32>
    %149 = vector.shape_cast %148 : vector<8xf32> to vector<1x8xf32>
    %c3 = arith.constant 3 : index
    %c0_67 = arith.constant 0 : index
    %c0_68 = arith.constant 0 : index
    %c0_69 = arith.constant 0 : index
    %150 = vector.load %arg6[%c3, %c0_67, %c0_68, %c0_69] : memref<4x8x8x8xf32, #tpu.memory_space<vmem>>, vector<1x8x8x8xf32>
    %151 = vector.shape_cast %150 : vector<1x8x8x8xf32> to vector<8x8x8xf32>
    %152 = vector.shape_cast %149 : vector<1x8xf32> to vector<1x1x8xf32>
    %153 = vector.broadcast %152 : vector<1x1x8xf32> to vector<8x8x8xf32>
    %154 = arith.mulf %151, %153 : vector<8x8x8xf32>
    %cst_70 = arith.constant dense<0.000000e+00> : vector<8x8xf32>
    %155 = vector.multi_reduction <add>, %154, %cst_70 [2] : vector<8x8x8xf32> to vector<8x8xf32>
    %cst_71 = arith.constant dense<0.000000e+00> : vector<8x8xf32>
    %156 = tpu.matmul %147, %155, %cst_71 {dimension_numbers = #tpu.dot_dimension_numbers<[1], [0], [0], [1], [0, 0, 1, 1], [], []>} : vector<8x8xf32>, vector<8x8xf32>, vector<8x8xf32> -> vector<8x8xf32>
    %cst_72 = arith.constant 0.0441941731 : f32
    %157 = vector.broadcast %cst_72 : f32 to vector<8x8xf32>
    %158 = arith.mulf %156, %157 : vector<8x8xf32>
    %cst_73 = arith.constant dense<0xFF800000> : vector<8xf32>
    %159 = vector.multi_reduction <maximumf>, %158, %cst_73 [1] : vector<8x8xf32> to vector<8xf32>
    %160 = vector.shape_cast %159 : vector<8xf32> to vector<8x1xf32>
    %161 = vector.broadcast %160 : vector<8x1xf32> to vector<8x8xf32>
    %162 = arith.subf %158, %161 : vector<8x8xf32>
    %163 = math.exp %162 : vector<8x8xf32>
    %cst_74 = arith.constant dense<0.000000e+00> : vector<8xf32>
    %164 = vector.multi_reduction <add>, %163, %cst_74 [1] : vector<8x8xf32> to vector<8xf32>
    %165 = vector.shape_cast %164 : vector<8xf32> to vector<8x1xf32>
    %166 = tpu.reciprocal %165 {approx = true} : vector<8x1xf32> -> vector<8x1xf32>
    %167 = vector.broadcast %166 : vector<8x1xf32> to vector<8x8xf32>
    %168 = arith.mulf %163, %167 : vector<8x8xf32>
    %c0_75 = arith.constant 0 : index
    %c3_76 = arith.constant 3 : index
    %c0_77 = arith.constant 0 : index
    %c0_78 = arith.constant 0 : index
    %169 = vector.load %arg16[%c0_75, %c3_76, %c0_77, %c0_78] : memref<1x4x8x8xf32, #tpu.memory_space<vmem>>, vector<1x1x8x8xf32>
    %170 = vector.shape_cast %169 : vector<1x1x8x8xf32> to vector<8x8xf32>
    %171 = vector.shape_cast %168 : vector<8x8xf32> to vector<1x1x8x8xf32>
    tpu.vector_store %arg16[%c0_75, %c3_76, %c0_77, %c0_78], %171 {strides = array<i32>} : memref<1x4x8x8xf32, #tpu.memory_space<vmem>>, vector<1x1x8x8xf32>,
    %cst_79 = arith.constant dense<0.000000e+00> : vector<8x8xf32>
    %172 = tpu.matmul %168, %147, %cst_79 {dimension_numbers = #tpu.dot_dimension_numbers<[1], [0], [0], [1], [0, 0, 1, 1], [], []>} : vector<8x8xf32>, vector<8x8xf32>, vector<8x8xf32> -> vector<8x8xf32>
    %173 = tpu.concatenate %64, %100, %136, %172 in 1 : vector<8x8xf32>, vector<8x8xf32>, vector<8x8xf32>, vector<8x8xf32> -> vector<8x32xf32>
    %c0_80 = arith.constant 0 : index
    %c0_81 = arith.constant 0 : index
    %174 = vector.load %arg7[%c0_80, %c0_81] : memref<32x32xf32, #tpu.memory_space<vmem>>, vector<32x32xf32>
    %cst_82 = arith.constant dense<0.000000e+00> : vector<8x32xf32>
    %175 = tpu.matmul %173, %174, %cst_82 {dimension_numbers = #tpu.dot_dimension_numbers<[1], [0], [0], [1], [0, 0, 1, 1], [], []>} : vector<8x32xf32>, vector<32x32xf32>, vector<8x32xf32> -> vector<8x32xf32>
    %c0_83 = arith.constant 0 : index
    %c0_84 = arith.constant 0 : index
    %176 = vector.load %arg8[%c0_83, %c0_84] : memref<1x32xf32, #tpu.memory_space<vmem>>, vector<1x32xf32>
    %177 = vector.broadcast %176 : vector<1x32xf32> to vector<8x32xf32>
    %178 = arith.addf %175, %177 : vector<8x32xf32>
    %179 = arith.addf %178, %1 : vector<8x32xf32>
    %cst_85 = arith.constant dense<0.000000e+00> : vector<8xf32>
    %180 = vector.multi_reduction <add>, %179, %cst_85 [1] : vector<8x32xf32> to vector<8xf32>
    %181 = vector.shape_cast %180 : vector<8xf32> to vector<8x1xf32>
    %cst_86 = arith.constant 3.200000e+01 : f32
    %182 = vector.broadcast %cst_86 : f32 to vector<8x1xf32>
    %183 = arith.divf %181, %182 : vector<8x1xf32>
    %184 = vector.broadcast %183 : vector<8x1xf32> to vector<8x32xf32>
    %185 = arith.subf %179, %184 : vector<8x32xf32>
    %186 = arith.mulf %185, %185 : vector<8x32xf32>
    %cst_87 = arith.constant dense<0.000000e+00> : vector<8xf32>
    %187 = vector.multi_reduction <add>, %186, %cst_87 [1] : vector<8x32xf32> to vector<8xf32>
    %188 = vector.shape_cast %187 : vector<8xf32> to vector<8x1xf32>
    %cst_88 = arith.constant 3.200000e+01 : f32
    %189 = vector.broadcast %cst_88 : f32 to vector<8x1xf32>
    %190 = arith.divf %188, %189 : vector<8x1xf32>
    %cst_89 = arith.constant 9.99999974E-6 : f32
    %191 = vector.broadcast %cst_89 : f32 to vector<8x1xf32>
    %192 = arith.addf %190, %191 : vector<8x1xf32>
    %193 = math.rsqrt %192 : vector<8x1xf32>
    %194 = vector.broadcast %193 : vector<8x1xf32> to vector<8x32xf32>
    %195 = arith.mulf %185, %194 : vector<8x32xf32>
    %c0_90 = arith.constant 0 : index
    %c0_91 = arith.constant 0 : index
    %196 = vector.load %arg9[%c0_90, %c0_91] : memref<1x32xf32, #tpu.memory_space<vmem>>, vector<1x32xf32>
    %197 = vector.broadcast %196 : vector<1x32xf32> to vector<8x32xf32>
    %198 = arith.mulf %195, %197 : vector<8x32xf32>
    %c0_92 = arith.constant 0 : index
    %c0_93 = arith.constant 0 : index
    %199 = vector.load %arg10[%c0_92, %c0_93] : memref<1x32xf32, #tpu.memory_space<vmem>>, vector<1x32xf32>
    %200 = vector.broadcast %199 : vector<1x32xf32> to vector<8x32xf32>
    %201 = arith.addf %198, %200 : vector<8x32xf32>
    %c0_94 = arith.constant 0 : index
    %c0_95 = arith.constant 0 : index
    %202 = vector.load %arg11[%c0_94, %c0_95] : memref<32x64xf32, #tpu.memory_space<vmem>>, vector<32x64xf32>
    %cst_96 = arith.constant dense<0.000000e+00> : vector<8x64xf32>
    %203 = tpu.matmul %201, %202, %cst_96 {dimension_numbers = #tpu.dot_dimension_numbers<[1], [0], [0], [1], [0, 0, 1, 1], [], []>} : vector<8x32xf32>, vector<32x64xf32>, vector<8x64xf32> -> vector<8x64xf32>
    %c0_97 = arith.constant 0 : index
    %c0_98 = arith.constant 0 : index
    %204 = vector.load %arg12[%c0_97, %c0_98] : memref<1x64xf32, #tpu.memory_space<vmem>>, vector<1x64xf32>
    %205 = vector.broadcast %204 : vector<1x64xf32> to vector<8x64xf32>
    %206 = arith.addf %203, %205 : vector<8x64xf32>
    %cst_99 = arith.constant 5.000000e-01 : f32
    %207 = vector.broadcast %cst_99 : f32 to vector<8x64xf32>
    %208 = arith.mulf %207, %206 : vector<8x64xf32>
    %cst_100 = arith.constant 0.707106769 : f32
    %209 = vector.broadcast %cst_100 : f32 to vector<8x64xf32>
    %210 = arith.mulf %206, %209 : vector<8x64xf32>
    %211 = math.absf %210 : vector<8x64xf32>
    %cst_101 = arith.constant 0.327591091 : f32
    %212 = vector.broadcast %cst_101 : f32 to vector<8x64xf32>
    %213 = arith.mulf %212, %211 : vector<8x64xf32>
    %cst_102 = arith.constant 1.000000e+00 : f32
    %214 = vector.broadcast %cst_102 : f32 to vector<8x64xf32>
    %215 = arith.addf %214, %213 : vector<8x64xf32>
    %cst_103 = arith.constant 1.000000e+00 : f32
    %216 = vector.broadcast %cst_103 : f32 to vector<8x64xf32>
    %217 = arith.divf %216, %215 : vector<8x64xf32>
    %cst_104 = arith.constant 1.06140542 : f32
    %218 = vector.broadcast %cst_104 : f32 to vector<8x64xf32>
    %219 = arith.mulf %218, %217 : vector<8x64xf32>
    %cst_105 = arith.constant -1.45315206 : f32
    %220 = vector.broadcast %cst_105 : f32 to vector<8x64xf32>
    %221 = arith.addf %219, %220 : vector<8x64xf32>
    %222 = arith.mulf %221, %217 : vector<8x64xf32>
    %cst_106 = arith.constant 1.42141378 : f32
    %223 = vector.broadcast %cst_106 : f32 to vector<8x64xf32>
    %224 = arith.addf %222, %223 : vector<8x64xf32>
    %225 = arith.mulf %224, %217 : vector<8x64xf32>
    %cst_107 = arith.constant -0.284496725 : f32
    %226 = vector.broadcast %cst_107 : f32 to vector<8x64xf32>
    %227 = arith.addf %225, %226 : vector<8x64xf32>
    %228 = arith.mulf %227, %217 : vector<8x64xf32>
    %cst_108 = arith.constant 0.254829586 : f32
    %229 = vector.broadcast %cst_108 : f32 to vector<8x64xf32>
    %230 = arith.addf %228, %229 : vector<8x64xf32>
    %231 = arith.mulf %230, %217 : vector<8x64xf32>
    %cst_109 = arith.constant 0.000000e+00 : f32
    %232 = vector.broadcast %cst_109 : f32 to vector<8x64xf32>
    %233 = arith.subf %232, %211 : vector<8x64xf32>
    %234 = arith.mulf %233, %211 : vector<8x64xf32>
    %235 = math.exp %234 : vector<8x64xf32>
    %236 = arith.mulf %231, %235 : vector<8x64xf32>
    %cst_110 = arith.constant 1.000000e+00 : f32
    %237 = vector.broadcast %cst_110 : f32 to vector<8x64xf32>
    %238 = arith.subf %237, %236 : vector<8x64xf32>
    %cst_111 = arith.constant 0.000000e+00 : f32
    %239 = vector.broadcast %cst_111 : f32 to vector<8x64xf32>
    %240 = arith.cmpf olt, %210, %239 : vector<8x64xf32>
    %cst_112 = arith.constant 0.000000e+00 : f32
    %241 = vector.broadcast %cst_112 : f32 to vector<8x64xf32>
    %242 = arith.subf %241, %238 : vector<8x64xf32>
    %243 = arith.select %240, %242, %238 : vector<8x64xi1>, vector<8x64xf32>
    %cst_113 = arith.constant 1.000000e+00 : f32
    %244 = vector.broadcast %cst_113 : f32 to vector<8x64xf32>
    %245 = arith.addf %244, %243 : vector<8x64xf32>
    %246 = arith.mulf %208, %245 : vector<8x64xf32>
    %c0_114 = arith.constant 0 : index
    %c0_115 = arith.constant 0 : index
    %247 = vector.load %arg13[%c0_114, %c0_115] : memref<64x32xf32, #tpu.memory_space<vmem>>, vector<64x32xf32>
    %cst_116 = arith.constant dense<0.000000e+00> : vector<8x32xf32>
    %248 = tpu.matmul %246, %247, %cst_116 {dimension_numbers = #tpu.dot_dimension_numbers<[1], [0], [0], [1], [0, 0, 1, 1], [], []>} : vector<8x64xf32>, vector<64x32xf32>, vector<8x32xf32> -> vector<8x32xf32>
    %c0_117 = arith.constant 0 : index
    %c0_118 = arith.constant 0 : index
    %249 = vector.load %arg14[%c0_117, %c0_118] : memref<1x32xf32, #tpu.memory_space<vmem>>, vector<1x32xf32>
    %250 = vector.broadcast %249 : vector<1x32xf32> to vector<8x32xf32>
    %251 = arith.addf %248, %250 : vector<8x32xf32>
    %252 = arith.addf %251, %179 : vector<8x32xf32>
    %c0_119 = arith.constant 0 : index
    %c0_120 = arith.constant 0 : index
    %c0_121 = arith.constant 0 : index
    %253 = vector.load %arg15[%c0_119, %c0_120, %c0_121] : memref<1x8x32xf32, #tpu.memory_space<vmem>>, vector<1x8x32xf32>
    %254 = vector.shape_cast %253 : vector<1x8x32xf32> to vector<8x32xf32>
    %255 = vector.shape_cast %252 : vector<8x32xf32> to vector<1x8x32xf32>
    tpu.vector_store %arg15[%c0_119, %c0_120, %c0_121], %255 {strides = array<i32>} : memref<1x8x32xf32, #tpu.memory_space<vmem>>, vector<1x8x32xf32>,
    return
  }
  func.func @transform_0(%arg0: i32) -> (i32, i32, i32) {
    %c0_i32 = arith.constant 0 : i32
    %c0_i32_0 = arith.constant 0 : i32
    %c0_i32_1 = arith.constant 0 : i32
    return %arg0, %c0_i32, %c0_i32_0 : i32, i32, i32
  }
  func.func @transform_1(%arg0: i32) -> (i32, i32) {
    %c0_i32 = arith.constant 0 : i32
    %c0_i32_0 = arith.constant 0 : i32
    %c0_i32_1 = arith.constant 0 : i32
    return %c0_i32, %c0_i32_0 : i32, i32
  }
  func.func @transform_2(%arg0: i32) -> (i32, i32) {
    %c0_i32 = arith.constant 0 : i32
    %c0_i32_0 = arith.constant 0 : i32
    %c0_i32_1 = arith.constant 0 : i32
    return %c0_i32, %c0_i32_0 : i32, i32
  }
  func.func @transform_3(%arg0: i32) -> (i32, i32) {
    %c0_i32 = arith.constant 0 : i32
    %c0_i32_0 = arith.constant 0 : i32
    %c0_i32_1 = arith.constant 0 : i32
    return %c0_i32, %c0_i32_0 : i32, i32
  }
  func.func @transform_4(%arg0: i32) -> (i32, i32) {
    %c0_i32 = arith.constant 0 : i32
    %c0_i32_0 = arith.constant 0 : i32
    %c0_i32_1 = arith.constant 0 : i32
    return %c0_i32, %c0_i32_0 : i32, i32
  }
  func.func @transform_5(%arg0: i32) -> (i32, i32, i32, i32) {
    %c0_i32 = arith.constant 0 : i32
    %c0_i32_0 = arith.constant 0 : i32
    %c0_i32_1 = arith.constant 0 : i32
    %c0_i32_2 = arith.constant 0 : i32
    %c0_i32_3 = arith.constant 0 : i32
    return %c0_i32, %c0_i32_0, %c0_i32_1, %c0_i32_2 : i32, i32, i32, i32
  }
  func.func @transform_6(%arg0: i32) -> (i32, i32) {
    %c0_i32 = arith.constant 0 : i32
    %c0_i32_0 = arith.constant 0 : i32
    %c0_i32_1 = arith.constant 0 : i32
    return %c0_i32, %c0_i32_0 : i32, i32
  }
  func.func @transform_7(%arg0: i32) -> (i32, i32) {
    %c0_i32 = arith.constant 0 : i32
    %c0_i32_0 = arith.constant 0 : i32
    %c0_i32_1 = arith.constant 0 : i32
    return %c0_i32, %c0_i32_0 : i32, i32
  }
  func.func @transform_8(%arg0: i32) -> (i32, i32) {
    %c0_i32 = arith.constant 0 : i32
    %c0_i32_0 = arith.constant 0 : i32
    %c0_i32_1 = arith.constant 0 : i32
    return %c0_i32, %c0_i32_0 : i32, i32
  }
  func.func @transform_9(%arg0: i32) -> (i32, i32) {
    %c0_i32 = arith.constant 0 : i32
    %c0_i32_0 = arith.constant 0 : i32
    %c0_i32_1 = arith.constant 0 : i32
    return %c0_i32, %c0_i32_0 : i32, i32
  }
  func.func @transform_10(%arg0: i32) -> (i32, i32) {
    %c0_i32 = arith.constant 0 : i32
    %c0_i32_0 = arith.constant 0 : i32
    %c0_i32_1 = arith.constant 0 : i32
    return %c0_i32, %c0_i32_0 : i32, i32
  }
  func.func @transform_11(%arg0: i32) -> (i32, i32) {
    %c0_i32 = arith.constant 0 : i32
    %c0_i32_0 = arith.constant 0 : i32
    %c0_i32_1 = arith.constant 0 : i32
    return %c0_i32, %c0_i32_0 : i32, i32
  }
  func.func @transform_12(%arg0: i32) -> (i32, i32) {
    %c0_i32 = arith.constant 0 : i32
    %c0_i32_0 = arith.constant 0 : i32
    %c0_i32_1 = arith.constant 0 : i32
    return %c0_i32, %c0_i32_0 : i32, i32
  }
  func.func @transform_13(%arg0: i32) -> (i32, i32) {
    %c0_i32 = arith.constant 0 : i32
    %c0_i32_0 = arith.constant 0 : i32
    %c0_i32_1 = arith.constant 0 : i32
    return %c0_i32, %c0_i32_0 : i32, i32
  }
  func.func @transform_14(%arg0: i32) -> (i32, i32, i32) {
    %c0_i32 = arith.constant 0 : i32
    %c0_i32_0 = arith.constant 0 : i32
    %c0_i32_1 = arith.constant 0 : i32
    return %arg0, %c0_i32, %c0_i32_0 : i32, i32, i32
  }
  func.func @transform_15(%arg0: i32) -> (i32, i32, i32, i32) {
    %c0_i32 = arith.constant 0 : i32
    %c0_i32_0 = arith.constant 0 : i32
    %c0_i32_1 = arith.constant 0 : i32
    %c0_i32_2 = arith.constant 0 : i32
    return %arg0, %c0_i32, %c0_i32_0, %c0_i32_1 : i32, i32, i32, i32
  }
}

</mosaic_0001>

<llo_original>
// kernel: linear_block_forward.1
$region0: #{linear_block_forward.1}
  #allocation0 [shape = 'u32[]', space=smem, size = 0x4, offset = 0x4, fixed_abs, tag = 'smem constant byte address 0x4 - core index']
  #allocation1 [shape = 'u32[144,128]{1,0:T(1,128)}', space=vmem, size = 0x12000, scoped, tag = 'internal scratch']
  %s0 = inlined_call_operand.vmem [shape: f32[2,8,32], index: 0, kind: input, shape index: {}]
  %s1 = inlined_call_operand.vmem [shape: f32[1,32], index: 1, kind: input, shape index: {}]
  %s2 = inlined_call_operand.vmem [shape: f32[1,32], index: 2, kind: input, shape index: {}]
  %s3 = inlined_call_operand.vmem [shape: f32[32,32], index: 3, kind: input, shape index: {}]
  %s4 = inlined_call_operand.vmem [shape: f32[1,32], index: 4, kind: input, shape index: {}]
  %s5 = inlined_call_operand.vmem [shape: f32[4,8,8,8], index: 5, kind: input, shape index: {}]
  %s6 = inlined_call_operand.vmem [shape: f32[32,32], index: 6, kind: input, shape index: {}]
  %s7 = inlined_call_operand.vmem [shape: f32[1,32], index: 7, kind: input, shape index: {}]
  %s8 = inlined_call_operand.vmem [shape: f32[1,32], index: 8, kind: input, shape index: {}]
  %s9 = inlined_call_operand.vmem [shape: f32[1,32], index: 9, kind: input, shape index: {}]
  %s10 = inlined_call_operand.vmem [shape: f32[32,64], index: 10, kind: input, shape index: {}]
  %s11 = inlined_call_operand.vmem [shape: f32[1,64], index: 11, kind: input, shape index: {}]
  %s12 = inlined_call_operand.vmem [shape: f32[64,32], index: 12, kind: input, shape index: {}]
  %s13 = inlined_call_operand.vmem [shape: f32[1,32], index: 13, kind: input, shape index: {}]
  %s14 = inlined_call_operand.hbm [shape: f32[2,8,32], index: 14, kind: output, shape index: {0}]
  %s15 = inlined_call_operand.hbm [shape: f32[2,4,8,8], index: 15, kind: output, shape index: {1}]
  %16 = xla_tuple %s14, %s15
  %s17 = sld [smem:[#allocation0]]
  $region97: #{linear_block_forward.1} parent=0
    _
  %s19 = ssub.s32 1, %s17
  %s20 = scalar_select 0, %s19, %s17
  $region1: #{linear_block_forward.1} parent=0
    #allocation2 [shape = 'u8[8192]{0}', space=vmem, size = 0x2000, scoped, tag = 'output window, operand 0']
    #allocation3 [shape = 's32[2]{0}', space=sflag, size = 0x8, scoped, tag = 'scoped memory for linear_block_forward.1']
    #allocation4 [shape = 'u8[32768]{0}', space=vmem, size = 0x8000, scoped, tag = 'output window, operand 1']
    #allocation5 [shape = 's32[2]{0}', space=sflag, size = 0x8, scoped, tag = 'scoped memory for linear_block_forward.1']
    %21 = vsyncpa [#allocation3], 0
    %s22 = scalar_lea.sflag [#allocation3], 1
    %23 = vsyncpa %s22, 0
    %24 = vsyncpa [#allocation5], 0
    %s25 = scalar_lea.sflag [#allocation5], 1
    %26 = vsyncpa %s25, 0
    loop: start=0, step=1, limit=4
    $region2: #{linear_block_forward.1} parent=1 // loop_pre_header
      _
    $region3: #{linear_block_forward.1} parent=1 // loop_header
      %s28 = sphi 0, %s32
      %p29 = scmp.ge.s32.totalorder %s28, 4
      %s38 = sphi 0, %s40
      %s41 = sphi 0, %s38
      %s42 = sphi 0, %s41
      %s58 = sphi 0, %s42
      %s62 = sphi 0, %s62
      %s64 = sphi 0, %s62
      %s65 = sphi 0, %s64
      %s79 = sphi 0, %s65
      %s83 = sphi 0, %s83
      %s85 = sphi 0, %s83
      %s86 = sphi 0, %s85
      %s100 = sphi 0, %s86
      %s104 = sphi 0, %s104
      %s106 = sphi 0, %s104
      %s107 = sphi 0, %s106
      %s121 = sphi 0, %s107
      %s125 = sphi 0, %s125
      %s127 = sphi 0, %s125
      %s128 = sphi 0, %s127
      %s142 = sphi 0, %s128
      %s146 = sphi 0, %s146
      %s148 = sphi 0, %s146
      %s149 = sphi 0, %s148
      %s163 = sphi 0, %s149
      %s167 = sphi 0, %s167
      %s169 = sphi 0, %s167
      %s170 = sphi 0, %s169
      %s184 = sphi 0, %s170
      %s188 = sphi 0, %s188
      %s190 = sphi 0, %s188
      %s191 = sphi 0, %s190
      %s205 = sphi 0, %s191
      %s209 = sphi 0, %s209
      %s211 = sphi 0, %s209
      %s212 = sphi 0, %s211
      %s226 = sphi 0, %s212
      %s230 = sphi 0, %s230
      %s232 = sphi 0, %s230
      %s233 = sphi 0, %s232
      %s247 = sphi 0, %s233
      %s251 = sphi 0, %s251
      %s253 = sphi 0, %s251
      %s254 = sphi 0, %s253
      %s268 = sphi 0, %s254
      %s272 = sphi 0, %s272
      %s274 = sphi 0, %s272
      %s275 = sphi 0, %s274
      %s289 = sphi 0, %s275
      %s293 = sphi 0, %s293
      %s295 = sphi 0, %s293
      %s296 = sphi 0, %s295
      %s310 = sphi 0, %s296
      %s314 = sphi 0, %s314
      %s316 = sphi 0, %s314
      %s317 = sphi 0, %s316
      %s331 = sphi 0, %s317
      %s337 = sphi 0, %s339
      %s340 = sphi 0, %s337
      %s341 = sphi 0, %s340
      %s357 = sphi 0, %s341
      %s363 = sphi 0, %s365
      %s366 = sphi 0, %s363
      %s367 = sphi 0, %s366
      %s383 = sphi 0, %s367
    $region4: #{linear_block_forward.1} parent=1 // loop_header_branch
      %31 = sbr.rel (%p29) target = $region8
    $region5: #{linear_block_forward.1} parent=1 // loop_body
      %s33 = ssub.s32 %s28, 1
      %s34 = ssub.s32 %s28, 2
      %s35 = sadd.s32 %s28, 1
      %s36 = ssub.s32 %s28, %s35
      %p37 = scmp.eq.s32.totalorder %s36, 0
      %s39 = sadd.s32 %s38, 1
      %s40 = scalar_select %p37, %s38, %s39
      %p43 = pneg %p37
      %p44 = scmp.eq.s32.totalorder %s28, 1
      %p45 = por %p43, %p44
      %p46 = scmp.ne.s32.totalorder %s38, %s41
      %p47 = scmp.eq.s32.totalorder %s28, 0
      %p48 = por %p46, %p47
      %p49 = scmp.ne.s32.totalorder %s38, %s41
      %p50 = scmp.eq.s32.totalorder %s33, 1
      %p51 = por %p49, %p50
      %p52 = scmp.ne.s32.totalorder %s41, %s42
      %p53 = scmp.eq.s32.totalorder %s33, 0
      %p54 = por %p52, %p53
      %p55 = scmp.ne.s32.totalorder %s41, %s42
      %p56 = scmp.eq.s32.totalorder %s34, 1
      %p57 = por %p55, %p56
      %p59 = scmp.ne.s32.totalorder %s42, %s58
      %p60 = scmp.eq.s32.totalorder %s34, 0
      %p61 = por %p59, %p60
      %s63 = sadd.s32 %s62, 1
      %p66 = scmp.eq.s32.totalorder %s28, 1
      %p67 = scmp.ne.s32.totalorder %s62, %s64
      %p68 = scmp.eq.s32.totalorder %s28, 0
      %p69 = por %p67, %p68
      %p70 = scmp.ne.s32.totalorder %s62, %s64
      %p71 = scmp.eq.s32.totalorder %s33, 1
      %p72 = por %p70, %p71
      %p73 = scmp.ne.s32.totalorder %s64, %s65
      %p74 = scmp.eq.s32.totalorder %s33, 0
      %p75 = por %p73, %p74
      %p76 = scmp.ne.s32.totalorder %s64, %s65
      %p77 = scmp.eq.s32.totalorder %s34, 1
      %p78 = por %p76, %p77
      %p80 = scmp.ne.s32.totalorder %s65, %s79
      %p81 = scmp.eq.s32.totalorder %s34, 0
      %p82 = por %p80, %p81
      %s84 = sadd.s32 %s83, 1
      %p87 = scmp.eq.s32.totalorder %s28, 1
      %p88 = scmp.ne.s32.totalorder %s83, %s85
      %p89 = scmp.eq.s32.totalorder %s28, 0
      %p90 = por %p88, %p89
      %p91 = scmp.ne.s32.totalorder %s83, %s85
      %p92 = scmp.eq.s32.totalorder %s33, 1
      %p93 = por %p91, %p92
      %p94 = scmp.ne.s32.totalorder %s85, %s86
      %p95 = scmp.eq.s32.totalorder %s33, 0
      %p96 = por %p94, %p95
      %p97 = scmp.ne.s32.totalorder %s85, %s86
      %p98 = scmp.eq.s32.totalorder %s34, 1
      %p99 = por %p97, %p98
      %p101 = scmp.ne.s32.totalorder %s86, %s100
      %p102 = scmp.eq.s32.totalorder %s34, 0
      %p103 = por %p101, %p102
      %s105 = sadd.s32 %s104, 1
      %p108 = scmp.eq.s32.totalorder %s28, 1
      %p109 = scmp.ne.s32.totalorder %s104, %s106
      %p110 = scmp.eq.s32.totalorder %s28, 0
      %p111 = por %p109, %p110
      %p112 = scmp.ne.s32.totalorder %s104, %s106
      %p113 = scmp.eq.s32.totalorder %s33, 1
      %p114 = por %p112, %p113
      %p115 = scmp.ne.s32.totalorder %s106, %s107
      %p116 = scmp.eq.s32.totalorder %s33, 0
      %p117 = por %p115, %p116
      %p118 = scmp.ne.s32.totalorder %s106, %s107
      %p119 = scmp.eq.s32.totalorder %s34, 1
      %p120 = por %p118, %p119
      %p122 = scmp.ne.s32.totalorder %s107, %s121
      %p123 = scmp.eq.s32.totalorder %s34, 0
      %p124 = por %p122, %p123
      %s126 = sadd.s32 %s125, 1
      %p129 = scmp.eq.s32.totalorder %s28, 1
      %p130 = scmp.ne.s32.totalorder %s125, %s127
      %p131 = scmp.eq.s32.totalorder %s28, 0
      %p132 = por %p130, %p131
      %p133 = scmp.ne.s32.totalorder %s125, %s127
      %p134 = scmp.eq.s32.totalorder %s33, 1
      %p135 = por %p133, %p134
      %p136 = scmp.ne.s32.totalorder %s127, %s128
      %p137 = scmp.eq.s32.totalorder %s33, 0
      %p138 = por %p136, %p137
      %p139 = scmp.ne.s32.totalorder %s127, %s128
      %p140 = scmp.eq.s32.totalorder %s34, 1
      %p141 = por %p139, %p140
      %p143 = scmp.ne.s32.totalorder %s128, %s142
      %p144 = scmp.eq.s32.totalorder %s34, 0
      %p145 = por %p143, %p144
      %s147 = sadd.s32 %s146, 1
      %p150 = scmp.eq.s32.totalorder %s28, 1
      %p151 = scmp.ne.s32.totalorder %s146, %s148
      %p152 = scmp.eq.s32.totalorder %s28, 0
      %p153 = por %p151, %p152
      %p154 = scmp.ne.s32.totalorder %s146, %s148
      %p155 = scmp.eq.s32.totalorder %s33, 1
      %p156 = por %p154, %p155
      %p157 = scmp.ne.s32.totalorder %s148, %s149
      %p158 = scmp.eq.s32.totalorder %s33, 0
      %p159 = por %p157, %p158
      %p160 = scmp.ne.s32.totalorder %s148, %s149
      %p161 = scmp.eq.s32.totalorder %s34, 1
      %p162 = por %p160, %p161
      %p164 = scmp.ne.s32.totalorder %s149, %s163
      %p165 = scmp.eq.s32.totalorder %s34, 0
      %p166 = por %p164, %p165
      %s168 = sadd.s32 %s167, 1
      %p171 = scmp.eq.s32.totalorder %s28, 1
      %p172 = scmp.ne.s32.totalorder %s167, %s169
      %p173 = scmp.eq.s32.totalorder %s28, 0
      %p174 = por %p172, %p173
      %p175 = scmp.ne.s32.totalorder %s167, %s169
      %p176 = scmp.eq.s32.totalorder %s33, 1
      %p177 = por %p175, %p176
      %p178 = scmp.ne.s32.totalorder %s169, %s170
      %p179 = scmp.eq.s32.totalorder %s33, 0
      %p180 = por %p178, %p179
      %p181 = scmp.ne.s32.totalorder %s169, %s170
      %p182 = scmp.eq.s32.totalorder %s34, 1
      %p183 = por %p181, %p182
      %p185 = scmp.ne.s32.totalorder %s170, %s184
      %p186 = scmp.eq.s32.totalorder %s34, 0
      %p187 = por %p185, %p186
      %s189 = sadd.s32 %s188, 1
      %p192 = scmp.eq.s32.totalorder %s28, 1
      %p193 = scmp.ne.s32.totalorder %s188, %s190
      %p194 = scmp.eq.s32.totalorder %s28, 0
      %p195 = por %p193, %p194
      %p196 = scmp.ne.s32.totalorder %s188, %s190
      %p197 = scmp.eq.s32.totalorder %s33, 1
      %p198 = por %p196, %p197
      %p199 = scmp.ne.s32.totalorder %s190, %s191
      %p200 = scmp.eq.s32.totalorder %s33, 0
      %p201 = por %p199, %p200
      %p202 = scmp.ne.s32.totalorder %s190, %s191
      %p203 = scmp.eq.s32.totalorder %s34, 1
      %p204 = por %p202, %p203
      %p206 = scmp.ne.s32.totalorder %s191, %s205
      %p207 = scmp.eq.s32.totalorder %s34, 0
      %p208 = por %p206, %p207
      %s210 = sadd.s32 %s209, 1
      %p213 = scmp.eq.s32.totalorder %s28, 1
      %p214 = scmp.ne.s32.totalorder %s209, %s211
      %p215 = scmp.eq.s32.totalorder %s28, 0
      %p216 = por %p214, %p215
      %p217 = scmp.ne.s32.totalorder %s209, %s211
      %p218 = scmp.eq.s32.totalorder %s33, 1
      %p219 = por %p217, %p218
      %p220 = scmp.ne.s32.totalorder %s211, %s212
      %p221 = scmp.eq.s32.totalorder %s33, 0
      %p222 = por %p220, %p221
      %p223 = scmp.ne.s32.totalorder %s211, %s212
      %p224 = scmp.eq.s32.totalorder %s34, 1
      %p225 = por %p223, %p224
      %p227 = scmp.ne.s32.totalorder %s212, %s226
      %p228 = scmp.eq.s32.totalorder %s34, 0
      %p229 = por %p227, %p228
      %s231 = sadd.s32 %s230, 1
      %p234 = scmp.eq.s32.totalorder %s28, 1
      %p235 = scmp.ne.s32.totalorder %s230, %s232
      %p236 = scmp.eq.s32.totalorder %s28, 0
      %p237 = por %p235, %p236
      %p238 = scmp.ne.s32.totalorder %s230, %s232
      %p239 = scmp.eq.s32.totalorder %s33, 1
      %p240 = por %p238, %p239
      %p241 = scmp.ne.s32.totalorder %s232, %s233
      %p242 = scmp.eq.s32.totalorder %s33, 0
      %p243 = por %p241, %p242
      %p244 = scmp.ne.s32.totalorder %s232, %s233
      %p245 = scmp.eq.s32.totalorder %s34, 1
      %p246 = por %p244, %p245
      %p248 = scmp.ne.s32.totalorder %s233, %s247
      %p249 = scmp.eq.s32.totalorder %s34, 0
      %p250 = por %p248, %p249
      %s252 = sadd.s32 %s251, 1
      %p255 = scmp.eq.s32.totalorder %s28, 1
      %p256 = scmp.ne.s32.totalorder %s251, %s253
      %p257 = scmp.eq.s32.totalorder %s28, 0
      %p258 = por %p256, %p257
      %p259 = scmp.ne.s32.totalorder %s251, %s253
      %p260 = scmp.eq.s32.totalorder %s33, 1
      %p261 = por %p259, %p260
      %p262 = scmp.ne.s32.totalorder %s253, %s254
      %p263 = scmp.eq.s32.totalorder %s33, 0
      %p264 = por %p262, %p263
      %p265 = scmp.ne.s32.totalorder %s253, %s254
      %p266 = scmp.eq.s32.totalorder %s34, 1
      %p267 = por %p265, %p266
      %p269 = scmp.ne.s32.totalorder %s254, %s268
      %p270 = scmp.eq.s32.totalorder %s34, 0
      %p271 = por %p269, %p270
      %s273 = sadd.s32 %s272, 1
      %p276 = scmp.eq.s32.totalorder %s28, 1
      %p277 = scmp.ne.s32.totalorder %s272, %s274
      %p278 = scmp.eq.s32.totalorder %s28, 0
      %p279 = por %p277, %p278
      %p280 = scmp.ne.s32.totalorder %s272, %s274
      %p281 = scmp.eq.s32.totalorder %s33, 1
      %p282 = por %p280, %p281
      %p283 = scmp.ne.s32.totalorder %s274, %s275
      %p284 = scmp.eq.s32.totalorder %s33, 0
      %p285 = por %p283, %p284
      %p286 = scmp.ne.s32.totalorder %s274, %s275
      %p287 = scmp.eq.s32.totalorder %s34, 1
      %p288 = por %p286, %p287
      %p290 = scmp.ne.s32.totalorder %s275, %s289
      %p291 = scmp.eq.s32.totalorder %s34, 0
      %p292 = por %p290, %p291
      %s294 = sadd.s32 %s293, 1
      %p297 = scmp.eq.s32.totalorder %s28, 1
      %p298 = scmp.ne.s32.totalorder %s293, %s295
      %p299 = scmp.eq.s32.totalorder %s28, 0
      %p300 = por %p298, %p299
      %p301 = scmp.ne.s32.totalorder %s293, %s295
      %p302 = scmp.eq.s32.totalorder %s33, 1
      %p303 = por %p301, %p302
      %p304 = scmp.ne.s32.totalorder %s295, %s296
      %p305 = scmp.eq.s32.totalorder %s33, 0
      %p306 = por %p304, %p305
      %p307 = scmp.ne.s32.totalorder %s295, %s296
      %p308 = scmp.eq.s32.totalorder %s34, 1
      %p309 = por %p307, %p308
      %p311 = scmp.ne.s32.totalorder %s296, %s310
      %p312 = scmp.eq.s32.totalorder %s34, 0
      %p313 = por %p311, %p312
      %s315 = sadd.s32 %s314, 1
      %p318 = scmp.eq.s32.totalorder %s28, 1
      %p319 = scmp.ne.s32.totalorder %s314, %s316
      %p320 = scmp.eq.s32.totalorder %s28, 0
      %p321 = por %p319, %p320
      %p322 = scmp.ne.s32.totalorder %s314, %s316
      %p323 = scmp.eq.s32.totalorder %s33, 1
      %p324 = por %p322, %p323
      %p325 = scmp.ne.s32.totalorder %s316, %s317
      %p326 = scmp.eq.s32.totalorder %s33, 0
      %p327 = por %p325, %p326
      %p328 = scmp.ne.s32.totalorder %s316, %s317
      %p329 = scmp.eq.s32.totalorder %s34, 1
      %p330 = por %p328, %p329
      %p332 = scmp.ne.s32.totalorder %s317, %s331
      %p333 = scmp.eq.s32.totalorder %s34, 0
      %p334 = por %p332, %p333
      %s335 = ssub.s32 %s28, %s35
      %p336 = scmp.eq.s32.totalorder %s335, 0
      %s338 = sadd.s32 %s337, 1
      %s339 = scalar_select %p336, %s337, %s338
      %p342 = pneg %p336
      %p343 = scmp.eq.s32.totalorder %s28, 1
      %p344 = por %p342, %p343
      %p345 = scmp.ne.s32.totalorder %s337, %s340
      %p346 = scmp.eq.s32.totalorder %s28, 0
      %p347 = por %p345, %p346
      %p348 = scmp.ne.s32.totalorder %s337, %s340
      %p349 = scmp.eq.s32.totalorder %s33, 1
      %p350 = por %p348, %p349
      %p351 = scmp.ne.s32.totalorder %s340, %s341
      %p352 = scmp.eq.s32.totalorder %s33, 0
      %p353 = por %p351, %p352
      %p354 = scmp.ne.s32.totalorder %s340, %s341
      %p355 = scmp.eq.s32.totalorder %s34, 1
      %p356 = por %p354, %p355
      %p358 = scmp.ne.s32.totalorder %s341, %s357
      %p359 = scmp.eq.s32.totalorder %s34, 0
      %p360 = por %p358, %p359
      %s361 = ssub.s32 %s28, %s35
      %p362 = scmp.eq.s32.totalorder %s361, 0
      %s364 = sadd.s32 %s363, 1
      %s365 = scalar_select %p362, %s363, %s364
      %p368 = pneg %p362
      %p369 = scmp.eq.s32.totalorder %s28, 1
      %p370 = por %p368, %p369
      %p371 = scmp.ne.s32.totalorder %s363, %s366
      %p372 = scmp.eq.s32.totalorder %s28, 0
      %p373 = por %p371, %p372
      %p374 = scmp.ne.s32.totalorder %s363, %s366
      %p375 = scmp.eq.s32.totalorder %s33, 1
      %p376 = por %p374, %p375
      %p377 = scmp.ne.s32.totalorder %s366, %s367
      %p378 = scmp.eq.s32.totalorder %s33, 0
      %p379 = por %p377, %p378
      %p380 = scmp.ne.s32.totalorder %s366, %s367
      %p381 = scmp.eq.s32.totalorder %s34, 1
      %p382 = por %p380, %p381
      %p384 = scmp.ne.s32.totalorder %s367, %s383
      %p385 = scmp.eq.s32.totalorder %s34, 0
      %p386 = por %p384, %p385
      %p387 = scmp.le.s32.totalorder 1, %s28
      %p388 = scmp.lt.s32.totalorder %s28, 3
      %p389 = pnand %p387, %p388
      %p390 = pneg %p389
      // Predicated region
      $region9: #{linear_block_forward.1} parent=5 // pred_check
        _
      $region10: #{linear_block_forward.1} parent=5 // pred_check_branch
        %392 = sbr.rel (%p389) target = $region12
      $region11: #{linear_block_forward.1} parent=5 // pred_region
        %s393 = ssub.s32 %s28, 1
        // Predicated region
        $region13: #{linear_block_forward.1} parent=11 // pred_check
          %p394 = pneg %p75
        $region14: #{linear_block_forward.1} parent=11 // pred_check_branch
          %396 = sbr.rel (%p394) target = $region16
        $region15: #{linear_block_forward.1} parent=11 // pred_region
          _
        $region16: #{linear_block_forward.1} parent=11 // pred_fallthru
          _
        // Predicated region
        $region17: #{linear_block_forward.1} parent=11 // pred_check
          %p397 = pneg %p96
        $region18: #{linear_block_forward.1} parent=11 // pred_check_branch
          %399 = sbr.rel (%p397) target = $region20
        $region19: #{linear_block_forward.1} parent=11 // pred_region
          _
        $region20: #{linear_block_forward.1} parent=11 // pred_fallthru
          _
        // Predicated region
        $region21: #{linear_block_forward.1} parent=11 // pred_check
          %p400 = pneg %p117
        $region22: #{linear_block_forward.1} parent=11 // pred_check_branch
          %402 = sbr.rel (%p400) target = $region24
        $region23: #{linear_block_forward.1} parent=11 // pred_region
          _
        $region24: #{linear_block_forward.1} parent=11 // pred_fallthru
          _
        // Predicated region
        $region25: #{linear_block_forward.1} parent=11 // pred_check
          %p403 = pneg %p138
        $region26: #{linear_block_forward.1} parent=11 // pred_check_branch
          %405 = sbr.rel (%p403) target = $region28
        $region27: #{linear_block_forward.1} parent=11 // pred_region
          _
        $region28: #{linear_block_forward.1} parent=11 // pred_fallthru
          _
        // Predicated region
        $region29: #{linear_block_forward.1} parent=11 // pred_check
          %p406 = pneg %p159
        $region30: #{linear_block_forward.1} parent=11 // pred_check_branch
          %408 = sbr.rel (%p406) target = $region32
        $region31: #{linear_block_forward.1} parent=11 // pred_region
          _
        $region32: #{linear_block_forward.1} parent=11 // pred_fallthru
          _
        // Predicated region
        $region33: #{linear_block_forward.1} parent=11 // pred_check
          %p409 = pneg %p180
        $region34: #{linear_block_forward.1} parent=11 // pred_check_branch
          %411 = sbr.rel (%p409) target = $region36
        $region35: #{linear_block_forward.1} parent=11 // pred_region
          _
        $region36: #{linear_block_forward.1} parent=11 // pred_fallthru
          _
        // Predicated region
        $region37: #{linear_block_forward.1} parent=11 // pred_check
          %p412 = pneg %p201
        $region38: #{linear_block_forward.1} parent=11 // pred_check_branch
          %414 = sbr.rel (%p412) target = $region40
        $region39: #{linear_block_forward.1} parent=11 // pred_region
          _
        $region40: #{linear_block_forward.1} parent=11 // pred_fallthru
          _
        // Predicated region
        $region41: #{linear_block_forward.1} parent=11 // pred_check
          %p415 = pneg %p222
        $region42: #{linear_block_forward.1} parent=11 // pred_check_branch
          %417 = sbr.rel (%p415) target = $region44
        $region43: #{linear_block_forward.1} parent=11 // pred_region
          _
        $region44: #{linear_block_forward.1} parent=11 // pred_fallthru
          _
        // Predicated region
        $region45: #{linear_block_forward.1} parent=11 // pred_check
          %p418 = pneg %p243
        $region46: #{linear_block_forward.1} parent=11 // pred_check_branch
          %420 = sbr.rel (%p418) target = $region48
        $region47: #{linear_block_forward.1} parent=11 // pred_region
          _
        $region48: #{linear_block_forward.1} parent=11 // pred_fallthru
          _
        // Predicated region
        $region49: #{linear_block_forward.1} parent=11 // pred_check
          %p421 = pneg %p264
        $region50: #{linear_block_forward.1} parent=11 // pred_check_branch
          %423 = sbr.rel (%p421) target = $region52
        $region51: #{linear_block_forward.1} parent=11 // pred_region
          _
        $region52: #{linear_block_forward.1} parent=11 // pred_fallthru
          _
        // Predicated region
        $region53: #{linear_block_forward.1} parent=11 // pred_check
          %p424 = pneg %p285
        $region54: #{linear_block_forward.1} parent=11 // pred_check_branch
          %426 = sbr.rel (%p424) target = $region56
        $region55: #{linear_block_forward.1} parent=11 // pred_region
          _
        $region56: #{linear_block_forward.1} parent=11 // pred_fallthru
          _
        // Predicated region
        $region57: #{linear_block_forward.1} parent=11 // pred_check
          %p427 = pneg %p306
        $region58: #{linear_block_forward.1} parent=11 // pred_check_branch
          %429 = sbr.rel (%p427) target = $region60
        $region59: #{linear_block_forward.1} parent=11 // pred_region
          _
        $region60: #{linear_block_forward.1} parent=11 // pred_fallthru
          _
        // Predicated region
        $region61: #{linear_block_forward.1} parent=11 // pred_check
          %p430 = pneg %p327
        $region62: #{linear_block_forward.1} parent=11 // pred_check_branch
          %432 = sbr.rel (%p430) target = $region64
        $region63: #{linear_block_forward.1} parent=11 // pred_region
          _
        $region64: #{linear_block_forward.1} parent=11 // pred_fallthru
          _
      $region12: #{linear_block_forward.1} parent=5 // pred_fallthru
        _
      %p433 = scmp.lt.s32.totalorder %s28, 2
      // Predicated region
      $region65: #{linear_block_forward.1} parent=5 // pred_check
        %p434 = pneg %p433
      $region66: #{linear_block_forward.1} parent=5 // pred_check_branch
        %436 = sbr.rel (%p434) target = $region68
      $region67: #{linear_block_forward.1} parent=5 // pred_region
        // Predicated region
        $region69: #{linear_block_forward.1} parent=67 // pred_check
          %p437 = pneg %p48
        $region70: #{linear_block_forward.1} parent=67 // pred_check_branch
          %439 = sbr.rel (%p437) target = $region72
        $region71: #{linear_block_forward.1} parent=67 // pred_region
          %p440 = scmp.lt.s32.totalorder %s28, 1
          %s441 = scalar_select %p440, %s28, 1
          %s442 = smul.addr %s441, 8
          %s443 = scalar_lea.vmem %s0, %s442
        $region72: #{linear_block_forward.1} parent=67 // pred_fallthru
          _
      $region68: #{linear_block_forward.1} parent=5 // pred_fallthru
        _
      %p444 = scmp.le.s32.totalorder 1, %s28
      %p445 = scmp.lt.s32.totalorder %s28, 3
      %p446 = pnand %p444, %p445
      %p447 = pneg %p446
      // Predicated region
      $region73: #{linear_block_forward.1} parent=5 // pred_check
        _
      $region74: #{linear_block_forward.1} parent=5 // pred_check_branch
        %449 = sbr.rel (%p446) target = $region76
      $region75: #{linear_block_forward.1} parent=5 // pred_region
        %s450 = ssub.s32 %s28, 1
        %p451 = scmp.lt.s32.totalorder %s33, 1
        %s452 = scalar_select %p451, %s33, 1
        %s453 = smul.addr %s452, 8
        %s454 = scalar_lea.vmem %s0, %s453
        %p455 = pneg %p54
        %p456 = pneg %p51
        %p457 = pneg %p75
        %p458 = pneg %p72
        %p459 = pneg %p96
        %p460 = pneg %p93
        %p461 = pneg %p117
        %p462 = pneg %p114
        %p463 = pneg %p138
        %p464 = pneg %p135
        %p465 = pneg %p159
        %p466 = pneg %p156
        %p467 = pneg %p180
        %p468 = pneg %p177
        %p469 = pneg %p201
        %p470 = pneg %p198
        %p471 = pneg %p222
        %p472 = pneg %p219
        %p473 = pneg %p243
        %p474 = pneg %p240
        %p475 = pneg %p264
        %p476 = pneg %p261
        %p477 = pneg %p285
        %p478 = pneg %p282
        %p479 = pneg %p306
        %p480 = pneg %p303
        %p481 = pneg %p327
        %p482 = pneg %p324
        %p483 = pneg %p353
        %p484 = pneg %p350
        %s485 = sand.u32 %s340, 1
        %s486 = scalar_lea.sflag [#allocation3], %s485
        %s487 = sand.u32 %s340, 1
        %s488 = smul.addr %s487, 8
        %s489 = scalar_lea.vmem [#allocation2], %s488
        %p490 = pneg %p379
        %p491 = pneg %p376
        %s492 = sand.u32 %s366, 1
        %s493 = scalar_lea.sflag [#allocation5], %s492
        %s494 = sand.u32 %s366, 1
        %s495 = smul.addr %s494, 32
        %s496 = scalar_lea.vmem [#allocation4], %s495
        %p497 = scmp.lt.s32.totalorder %s33, 1
        %s498 = scalar_select %p497, %s33, 1
        %s499 = smul.addr %s498, 8
        %s500 = scalar_lea.vmem %s0, %s499
        %v501 = vld [vmem:[%s500] sm:$0xff]
        %vm502 = vcmask 261120
        %v503 = vsel %vm502, %v501, 0.0
        %504 = vadd.xlane.f32.xlu0 %v503
        %v505 = vpop.xlane.xlu0 %504
        %v506 = vrcp.pop 32.0
        %v507 = vmul.f32 %v505, %v506
        %v508 = vsub.f32 %v501, %v507
        %v509 = vmul.f32 %v508, %v508
        %v510 = vsel %vm502, %v509, 0.0
        %511 = vadd.xlane.f32.xlu0 %v510
        %v512 = vpop.xlane.xlu0 %511
        %v513 = vmul.f32 %v512, %v506
        %v514 = vadd.f32 %v513, 1e-05
        %v515 = vrsqrt.pop %v514
        %v516 = vmul.f32 %v508, %v515
        %v517 = vld [vmem:[%s1] sm:$0x1]
        %v519 = vlaneseq
        %v520 = vshrl.u32 %v519, 7
        %v521 = vsub.s32 0, %v520
        %v522 = vrot.slane %v517, %v521
        %v524 = vmul.f32 %v516, %v522
        %v525 = vld [vmem:[%s2] sm:$0x1]
        %v527 = vlaneseq
        %v528 = vshrl.u32 %v527, 7
        %v529 = vsub.s32 0, %v528
        %v530 = vrot.slane %v525, %v529
        %v532 = vadd.f32 %v524, %v530
        %v533 = vld [vmem:[%s3] sm:$0xff]
        %v534 = vld [vmem:[%s3 + $0x8] sm:$0xff]
        %v535 = vld [vmem:[%s3 + $0x10] sm:$0xff]
        %v536 = vld [vmem:[%s3 + $0x18] sm:$0xff]
        %v537 = vld [vmem:[%s4] sm:$0x1]
        %v539 = vlaneseq
        %v540 = vshrl.u32 %v539, 7
        %v541 = vsub.s32 0, %v540
        %v542 = vrot.slane %v537, %v541
        %v545 = vsel %vm502, %v532, 0
        %547 = vmatprep.subr.mxu0 0.0
        %548 = vmatpush1.msra.mxu0 %v533
        %549 = vmatprep.subr.mxu0 0.0
        %550 = vmatpush1.msra.mxu0 %v534
        %551 = vmatprep.subr.mxu0 0.0
        %552 = vmatpush1.msra.mxu0 %v535
        %553 = vmatprep.subr.mxu0 0.0
        %554 = vmatpush1.msra.mxu0 %v536
        %555 = vmatprep.subr.mxu0 0.0
        %556 = vmatpush1.msra.mxu0 0.0
        %557 = vmatprep.subr.mxu0 0.0
        %558 = vmatpush1.msra.mxu0 0.0
        %559 = vmatprep.subr.mxu0 0.0
        %560 = vmatpush1.msra.mxu0 0.0
        %561 = vmatprep.subr.mxu0 0.0
        %562 = vmatpush1.msra.mxu0 0.0
        %563 = vmatprep.subr.mxu0 0.0
        %564 = vmatpush1.msra.mxu0 0.0
        %565 = vmatprep.subr.mxu0 0.0
        %566 = vmatpush1.msra.mxu0 0.0
        %567 = vmatprep.subr.mxu0 0.0
        %568 = vmatpush1.msra.mxu0 0.0
        %569 = vmatprep.subr.mxu0 0.0
        %570 = vmatpush1.msra.mxu0 0.0
        %571 = vmatprep.subr.mxu0 0.0
        %572 = vmatpush1.msra.mxu0 0.0
        %573 = vmatprep.subr.mxu0 0.0
        %574 = vmatpush1.msra.mxu0 0.0
        %575 = vmatprep.subr.mxu0 0.0
        %576 = vmatpush1.msra.mxu0 0.0
        %577 = vmatprep.subr.mxu0 0.0
        %578 = vmatpush1.msra.mxu0 0.0
        %579 = vmatprep.subr.mxu0 0.0
        %580 = vmatpush1.msra.mxu0 0.0
        %581 = vmatprep.subr.mxu0 0.0
        %582 = vmatpush1.msra.mxu0 0.0
        %583 = vmatprep.subr.mxu0 0.0
        %584 = vmatpush1.msra.mxu0 0.0
        %585 = vmatprep.subr.mxu0 0.0
        %586 = vmatpush1.msra.mxu0 0.0
        %587 = vmatprep.subr.mxu0 0.0
        %588 = vmatpush1.msra.mxu0 0.0
        %589 = vmatprep.subr.mxu0 0.0
        %590 = vmatpush1.msra.mxu0 0.0
        %591 = vmatprep.subr.mxu0 0.0
        %592 = vmatpush1.msra.mxu0 0.0
        %593 = vmatprep.subr.mxu0 0.0
        %594 = vmatpush1.msra.mxu0 0.0
        %595 = vmatprep.subr.mxu0 0.0
        %596 = vmatpush1.msra.mxu0 0.0
        %597 = vmatprep.subr.mxu0 0.0
        %598 = vmatpush1.msra.mxu0 0.0
        %599 = vmatprep.subr.mxu0 0.0
        %600 = vmatpush1.msra.mxu0 0.0
        %601 = vmatprep.subr.mxu0 0.0
        %602 = vmatpush1.msra.mxu0 0.0
        %603 = vmatprep.subr.mxu0 0.0
        %604 = vmatpush1.msra.mxu0 0.0
        %605 = vmatprep.subr.mxu0 0.0
        %606 = vmatpush1.msra.mxu0 0.0
        %607 = vmatprep.subr.mxu0 0.0
        %608 = vmatpush1.msra.mxu0 0.0
        %609 = vmatprep.subr.mxu0 0.0
        %610 = vmatpush1.msra.mxu0 0.0
        %611 = vmatprep.mubr.f32.mxu0 0.0
        %612 = vmatmul.mubr.f32.gmra.mrb[0].mxu0 %v545
        %v613 = vpop.f32.mrb[0].mxu0
        %v614 = vadd.f32 %v542, %v613
        %v615 = vpop.f32.mrb[0].mxu0
        %616 = vdwg.mxu0
        %vm617 = vcmask 64512
        %v618 = vsel %vm617, %v614, -inf
        %619 = vmax.xlane.f32.xlu0 %v618
        %v620 = vpop.xlane.xlu0 %619
        %v621 = vsub.f32 %v614, %v620
        %v622 = vmul.f32 %v621, 1.442695
        %v623 = vpow.pop %v622
        %v624 = vsel %vm617, %v623, 0.0
        %625 = vadd.xlane.f32.xlu0 %v624
        %v626 = vpop.xlane.xlu0 %625
        %v627 = vrcp.pop %v626
        %v628 = vmul.f32 %v623, %v627
        %v629 = vsel %vm617, %v628, 0.0
        %v630 = vrot.slane %v629, 4
        %v631 = vadd.f32 %v629, %v630
        %v632 = vrot.slane %v631, 2
        %v633 = vadd.f32 %v631, %v632
        %v634 = vrot.slane %v633, 1
        %v635 = vadd.f32 %v633, %v634
        %v636 = vld [vmem:[%s5] sm:$0xff]
        %v637 = vld [vmem:[%s5 + $0x8] sm:$0xff]
        %v638 = vld [vmem:[%s5 + $0x10] sm:$0xff]
        %v639 = vld [vmem:[%s5 + $0x18] sm:$0xff]
        %v640 = vld [vmem:[%s5 + $0x20] sm:$0xff]
        %v641 = vld [vmem:[%s5 + $0x28] sm:$0xff]
        %v642 = vld [vmem:[%s5 + $0x30] sm:$0xff]
        %v643 = vld [vmem:[%s5 + $0x38] sm:$0xff]
        %v644 = vmul.f32 %v636, %v635
        %v645 = vmul.f32 %v637, %v635
        %v646 = vmul.f32 %v638, %v635
        %v647 = vmul.f32 %v639, %v635
        %v648 = vmul.f32 %v640, %v635
        %v649 = vmul.f32 %v641, %v635
        %v650 = vmul.f32 %v642, %v635
        %v651 = vmul.f32 %v643, %v635
        %v652 = vsel %vm617, %v644, 0.0
        %653 = vadd.xlane.f32.xlu0 %v652
        %v654 = vpop.xlane.xlu0 %653
        %v655 = vsel %vm617, %v645, 0.0
        %656 = vadd.xlane.f32.xlu0 %v655
        %v657 = vpop.xlane.xlu0 %656
        %v658 = vsel %vm617, %v646, 0.0
        %659 = vadd.xlane.f32.xlu0 %v658
        %v660 = vpop.xlane.xlu0 %659
        %v661 = vsel %vm617, %v647, 0.0
        %662 = vadd.xlane.f32.xlu0 %v661
        %v663 = vpop.xlane.xlu0 %662
        %v664 = vsel %vm617, %v648, 0.0
        %665 = vadd.xlane.f32.xlu0 %v664
        %v666 = vpop.xlane.xlu0 %665
        %v667 = vsel %vm617, %v649, 0.0
        %668 = vadd.xlane.f32.xlu0 %v667
        %v669 = vpop.xlane.xlu0 %668
        %v670 = vsel %vm617, %v650, 0.0
        %671 = vadd.xlane.f32.xlu0 %v670
        %v672 = vpop.xlane.xlu0 %671
        %v673 = vsel %vm617, %v651, 0.0
        %674 = vadd.xlane.f32.xlu0 %v673
        %v675 = vpop.xlane.xlu0 %674
        %v684 = vlaneseq
        %v685 = vand.u32 %v684, 127
        %v686 = vlaneseq
        %v687 = vshrl.u32 %v686, 7
        %v688 = vsub.s32 %v685, %v687
        %v689 = vrot.slane %v654, %v688
        %v690 = vlaneseq
        %v691 = vshrl.u32 %v690, 7
        %v692 = vsub.s32 %v685, %v691
        %v693 = vrot.slane %v657, %v692
        %v694 = vlaneseq
        %v695 = vshrl.u32 %v694, 7
        %v696 = vsub.s32 %v685, %v695
        %v697 = vrot.slane %v660, %v696
        %v698 = vlaneseq
        %v699 = vshrl.u32 %v698, 7
        %v700 = vsub.s32 %v685, %v699
        %v701 = vrot.slane %v663, %v700
        %v702 = vlaneseq
        %v703 = vshrl.u32 %v702, 7
        %v704 = vsub.s32 %v685, %v703
        %v705 = vrot.slane %v666, %v704
        %v706 = vlaneseq
        %v707 = vshrl.u32 %v706, 7
        %v708 = vsub.s32 %v685, %v707
        %v709 = vrot.slane %v669, %v708
        %v710 = vlaneseq
        %v711 = vshrl.u32 %v710, 7
        %v712 = vsub.s32 %v685, %v711
        %v713 = vrot.slane %v672, %v712
        %v714 = vlaneseq
        %v715 = vshrl.u32 %v714, 7
        %v716 = vsub.s32 %v685, %v715
        %v717 = vrot.slane %v675, %v716
        %vm718 = vcmask 1041409
        %v719 = vsel %vm718, %v693, %v689
        %vm720 = vcmask 1042434
        %v721 = vsel %vm720, %v697, %v719
        %vm722 = vcmask 1043459
        %v723 = vsel %vm722, %v701, %v721
        %vm724 = vcmask 1044484
        %v725 = vsel %vm724, %v705, %v723
        %vm726 = vcmask 1045509
        %v727 = vsel %vm726, %v709, %v725
        %vm728 = vcmask 1046534
        %v729 = vsel %vm728, %v713, %v727
        %vm730 = vcmask 1047559
        %v731 = vsel %vm730, %v717, %v729
        %v734 = vsel %vm617, %v628, 0
        %736 = vmatprep.subr.mxu0 0.0
        %737 = vmatpush1.msra.mxu0 %v731
        %738 = vmatprep.subr.mxu0 0.0
        %739 = vmatpush1.msra.mxu0 0.0
        %740 = vmatprep.subr.mxu0 0.0
        %741 = vmatpush1.msra.mxu0 0.0
        %742 = vmatprep.subr.mxu0 0.0
        %743 = vmatpush1.msra.mxu0 0.0
        %744 = vmatprep.subr.mxu0 0.0
        %745 = vmatpush1.msra.mxu0 0.0
        %746 = vmatprep.subr.mxu0 0.0
        %747 = vmatpush1.msra.mxu0 0.0
        %748 = vmatprep.subr.mxu0 0.0
        %749 = vmatpush1.msra.mxu0 0.0
        %750 = vmatprep.subr.mxu0 0.0
        %751 = vmatpush1.msra.mxu0 0.0
        %752 = vmatprep.subr.mxu0 0.0
        %753 = vmatpush1.msra.mxu0 0.0
        %754 = vmatprep.subr.mxu0 0.0
        %755 = vmatpush1.msra.mxu0 0.0
        %756 = vmatprep.subr.mxu0 0.0
        %757 = vmatpush1.msra.mxu0 0.0
        %758 = vmatprep.subr.mxu0 0.0
        %759 = vmatpush1.msra.mxu0 0.0
        %760 = vmatprep.subr.mxu0 0.0
        %761 = vmatpush1.msra.mxu0 0.0
        %762 = vmatprep.subr.mxu0 0.0
        %763 = vmatpush1.msra.mxu0 0.0
        %764 = vmatprep.subr.mxu0 0.0
        %765 = vmatpush1.msra.mxu0 0.0
        %766 = vmatprep.subr.mxu0 0.0
        %767 = vmatpush1.msra.mxu0 0.0
        %768 = vmatprep.subr.mxu0 0.0
        %769 = vmatpush1.msra.mxu0 0.0
        %770 = vmatprep.subr.mxu0 0.0
        %771 = vmatpush1.msra.mxu0 0.0
        %772 = vmatprep.subr.mxu0 0.0
        %773 = vmatpush1.msra.mxu0 0.0
        %774 = vmatprep.subr.mxu0 0.0
        %775 = vmatpush1.msra.mxu0 0.0
        %776 = vmatprep.subr.mxu0 0.0
        %777 = vmatpush1.msra.mxu0 0.0
        %778 = vmatprep.subr.mxu0 0.0
        %779 = vmatpush1.msra.mxu0 0.0
        %780 = vmatprep.subr.mxu0 0.0
        %781 = vmatpush1.msra.mxu0 0.0
        %782 = vmatprep.subr.mxu0 0.0
        %783 = vmatpush1.msra.mxu0 0.0
        %784 = vmatprep.subr.mxu0 0.0
        %785 = vmatpush1.msra.mxu0 0.0
        %786 = vmatprep.subr.mxu0 0.0
        %787 = vmatpush1.msra.mxu0 0.0
        %788 = vmatprep.subr.mxu0 0.0
        %789 = vmatpush1.msra.mxu0 0.0
        %790 = vmatprep.subr.mxu0 0.0
        %791 = vmatpush1.msra.mxu0 0.0
        %792 = vmatprep.subr.mxu0 0.0
        %793 = vmatpush1.msra.mxu0 0.0
        %794 = vmatprep.subr.mxu0 0.0
        %795 = vmatpush1.msra.mxu0 0.0
        %796 = vmatprep.subr.mxu0 0.0
        %797 = vmatpush1.msra.mxu0 0.0
        %798 = vmatprep.subr.mxu0 0.0
        %799 = vmatpush1.msra.mxu0 0.0
        %800 = vmatprep.mubr.f32.mxu0 0.0
        %801 = vmatmul.mubr.f32.gmra.mrb[0].mxu0 %v734
        %v802 = vpop.f32.mrb[0].mxu0
        %v803 = vadd.f32 0.0, %v802
        %v804 = vpop.f32.mrb[0].mxu0
        %805 = vdwg.mxu0
        %v806 = vmul.f32 %v803, 0.044194173
        %v807 = vsel %vm617, %v806, -inf
        %808 = vmax.xlane.f32.xlu0 %v807
        %v809 = vpop.xlane.xlu0 %808
        %v810 = vsub.f32 %v806, %v809
        %v811 = vmul.f32 %v810, 1.442695
        %v812 = vpow.pop %v811
        %v813 = vsel %vm617, %v812, 0.0
        %814 = vadd.xlane.f32.xlu0 %v813
        %v815 = vpop.xlane.xlu0 %814
        %v816 = vrcp.pop %v815
        %v817 = vmul.f32 %v812, %v816
        %818 = vst.msk [vmem:[%s496] sm:$0xff] %vm617, %v817
        %v820 = vsel %vm617, %v817, 0
        %822 = vmatprep.subr.mxu0 0.0
        %823 = vmatpush1.msra.mxu0 %v628
        %824 = vmatprep.subr.mxu0 0.0
        %825 = vmatpush1.msra.mxu0 0.0
        %826 = vmatprep.subr.mxu0 0.0
        %827 = vmatpush1.msra.mxu0 0.0
        %828 = vmatprep.subr.mxu0 0.0
        %829 = vmatpush1.msra.mxu0 0.0
        %830 = vmatprep.subr.mxu0 0.0
        %831 = vmatpush1.msra.mxu0 0.0
        %832 = vmatprep.subr.mxu0 0.0
        %833 = vmatpush1.msra.mxu0 0.0
        %834 = vmatprep.subr.mxu0 0.0
        %835 = vmatpush1.msra.mxu0 0.0
        %836 = vmatprep.subr.mxu0 0.0
        %837 = vmatpush1.msra.mxu0 0.0
        %838 = vmatprep.subr.mxu0 0.0
        %839 = vmatpush1.msra.mxu0 0.0
        %840 = vmatprep.subr.mxu0 0.0
        %841 = vmatpush1.msra.mxu0 0.0
        %842 = vmatprep.subr.mxu0 0.0
        %843 = vmatpush1.msra.mxu0 0.0
        %844 = vmatprep.subr.mxu0 0.0
        %845 = vmatpush1.msra.mxu0 0.0
        %846 = vmatprep.subr.mxu0 0.0
        %847 = vmatpush1.msra.mxu0 0.0
        %848 = vmatprep.subr.mxu0 0.0
        %849 = vmatpush1.msra.mxu0 0.0
        %850 = vmatprep.subr.mxu0 0.0
        %851 = vmatpush1.msra.mxu0 0.0
        %852 = vmatprep.subr.mxu0 0.0
        %853 = vmatpush1.msra.mxu0 0.0
        %854 = vmatprep.subr.mxu0 0.0
        %855 = vmatpush1.msra.mxu0 0.0
        %856 = vmatprep.subr.mxu0 0.0
        %857 = vmatpush1.msra.mxu0 0.0
        %858 = vmatprep.subr.mxu0 0.0
        %859 = vmatpush1.msra.mxu0 0.0
        %860 = vmatprep.subr.mxu0 0.0
        %861 = vmatpush1.msra.mxu0 0.0
        %862 = vmatprep.subr.mxu0 0.0
        %863 = vmatpush1.msra.mxu0 0.0
        %864 = vmatprep.subr.mxu0 0.0
        %865 = vmatpush1.msra.mxu0 0.0
        %866 = vmatprep.subr.mxu0 0.0
        %867 = vmatpush1.msra.mxu0 0.0
        %868 = vmatprep.subr.mxu0 0.0
        %869 = vmatpush1.msra.mxu0 0.0
        %870 = vmatprep.subr.mxu0 0.0
        %871 = vmatpush1.msra.mxu0 0.0
        %872 = vmatprep.subr.mxu0 0.0
        %873 = vmatpush1.msra.mxu0 0.0
        %874 = vmatprep.subr.mxu0 0.0
        %875 = vmatpush1.msra.mxu0 0.0
        %876 = vmatprep.subr.mxu0 0.0
        %877 = vmatpush1.msra.mxu0 0.0
        %878 = vmatprep.subr.mxu0 0.0
        %879 = vmatpush1.msra.mxu0 0.0
        %880 = vmatprep.subr.mxu0 0.0
        %881 = vmatpush1.msra.mxu0 0.0
        %882 = vmatprep.subr.mxu0 0.0
        %883 = vmatpush1.msra.mxu0 0.0
        %884 = vmatprep.subr.mxu0 0.0
        %885 = vmatpush1.msra.mxu0 0.0
        %886 = vmatprep.mubr.f32.mxu0 0.0
        %887 = vmatmul.mubr.f32.gmra.mrb[0].mxu0 %v820
        %v888 = vpop.f32.mrb[0].mxu0
        %v889 = vadd.f32 0.0, %v888
        %v890 = vpop.f32.mrb[0].mxu0
        %891 = vdwg.mxu0
        %vm892 = vcmask 130112
        %v893 = vsel %vm892, %v614, -inf
        %894 = vmax.xlane.f32.xlu0 %v893
        %v895 = vpop.xlane.xlu0 %894
        %v896 = vsub.f32 %v614, %v895
        %v897 = vmul.f32 %v896, 1.442695
        %v898 = vpow.pop %v897
        %900 = vrot.lane.b32.xlu0 %v898, 120
        %v901 = vpop.permute.xlu0 %900
        %v903 = vsel %vm617, %v901, 0.0
        %904 = vadd.xlane.f32.xlu0 %v903
        %v905 = vpop.xlane.xlu0 %904
        %v906 = vrcp.pop %v905
        %v907 = vmul.f32 %v898, %v906
        %v908 = vsel %vm892, %v907, 0.0
        %v909 = vrot.slane %v908, 4
        %v910 = vadd.f32 %v908, %v909
        %v911 = vrot.slane %v910, 2
        %v912 = vadd.f32 %v910, %v911
        %v913 = vrot.slane %v912, 1
        %v914 = vadd.f32 %v912, %v913
        %s915 = scalar_lea.vmem %s5, 64
        %v916 = vld [vmem:[%s915] sm:$0xff]
        %v917 = vld [vmem:[%s915 + $0x8] sm:$0xff]
        %v918 = vld [vmem:[%s915 + $0x10] sm:$0xff]
        %v919 = vld [vmem:[%s915 + $0x18] sm:$0xff]
        %v920 = vld [vmem:[%s915 + $0x20] sm:$0xff]
        %v921 = vld [vmem:[%s915 + $0x28] sm:$0xff]
        %v922 = vld [vmem:[%s915 + $0x30] sm:$0xff]
        %v923 = vld [vmem:[%s915 + $0x38] sm:$0xff]
        %925 = vrot.lane.b32.xlu0 %v914, 120
        %v926 = vpop.permute.xlu0 %925
        %v928 = vmul.f32 %v916, %v926
        %v929 = vmul.f32 %v917, %v926
        %v930 = vmul.f32 %v918, %v926
        %v931 = vmul.f32 %v919, %v926
        %v932 = vmul.f32 %v920, %v926
        %v933 = vmul.f32 %v921, %v926
        %v934 = vmul.f32 %v922, %v926
        %v935 = vmul.f32 %v923, %v926
        %v936 = vsel %vm617, %v928, 0.0
        %937 = vadd.xlane.f32.xlu0 %v936
        %v938 = vpop.xlane.xlu0 %937
        %v939 = vsel %vm617, %v929, 0.0
        %940 = vadd.xlane.f32.xlu0 %v939
        %v941 = vpop.xlane.xlu0 %940
        %v942 = vsel %vm617, %v930, 0.0
        %943 = vadd.xlane.f32.xlu0 %v942
        %v944 = vpop.xlane.xlu0 %943
        %v945 = vsel %vm617, %v931, 0.0
        %946 = vadd.xlane.f32.xlu0 %v945
        %v947 = vpop.xlane.xlu0 %946
        %v948 = vsel %vm617, %v932, 0.0
        %949 = vadd.xlane.f32.xlu0 %v948
        %v950 = vpop.xlane.xlu0 %949
        %v951 = vsel %vm617, %v933, 0.0
        %952 = vadd.xlane.f32.xlu0 %v951
        %v953 = vpop.xlane.xlu0 %952
        %v954 = vsel %vm617, %v934, 0.0
        %955 = vadd.xlane.f32.xlu0 %v954
        %v956 = vpop.xlane.xlu0 %955
        %v957 = vsel %vm617, %v935, 0.0
        %958 = vadd.xlane.f32.xlu0 %v957
        %v959 = vpop.xlane.xlu0 %958
        %961 = vrot.lane.b32.xlu0 %v907, 120
        %v962 = vpop.permute.xlu0 %961
        %v971 = vlaneseq
        %v972 = vshrl.u32 %v971, 7
        %v973 = vsub.s32 %v685, %v972
        %v974 = vrot.slane %v938, %v973
        %v975 = vlaneseq
        %v976 = vshrl.u32 %v975, 7
        %v977 = vsub.s32 %v685, %v976
        %v978 = vrot.slane %v941, %v977
        %v979 = vlaneseq
        %v980 = vshrl.u32 %v979, 7
        %v981 = vsub.s32 %v685, %v980
        %v982 = vrot.slane %v944, %v981
        %v983 = vlaneseq
        %v984 = vshrl.u32 %v983, 7
        %v985 = vsub.s32 %v685, %v984
        %v986 = vrot.slane %v947, %v985
        %v987 = vlaneseq
        %v988 = vshrl.u32 %v987, 7
        %v989 = vsub.s32 %v685, %v988
        %v990 = vrot.slane %v950, %v989
        %v991 = vlaneseq
        %v992 = vshrl.u32 %v991, 7
        %v993 = vsub.s32 %v685, %v992
        %v994 = vrot.slane %v953, %v993
        %v995 = vlaneseq
        %v996 = vshrl.u32 %v995, 7
        %v997 = vsub.s32 %v685, %v996
        %v998 = vrot.slane %v956, %v997
        %v999 = vlaneseq
        %v1000 = vshrl.u32 %v999, 7
        %v1001 = vsub.s32 %v685, %v1000
        %v1002 = vrot.slane %v959, %v1001
        %v1003 = vsel %vm718, %v978, %v974
        %v1004 = vsel %vm720, %v982, %v1003
        %v1005 = vsel %vm722, %v986, %v1004
        %v1006 = vsel %vm724, %v990, %v1005
        %v1007 = vsel %vm726, %v994, %v1006
        %v1008 = vsel %vm728, %v998, %v1007
        %v1009 = vsel %vm730, %v1002, %v1008
        %v1011 = vsel %vm617, %v962, 0
        %1013 = vmatprep.subr.mxu0 0.0
        %1014 = vmatpush1.msra.mxu0 %v1009
        %1015 = vmatprep.subr.mxu0 0.0
        %1016 = vmatpush1.msra.mxu0 0.0
        %1017 = vmatprep.subr.mxu0 0.0
        %1018 = vmatpush1.msra.mxu0 0.0
        %1019 = vmatprep.subr.mxu0 0.0
        %1020 = vmatpush1.msra.mxu0 0.0
        %1021 = vmatprep.subr.mxu0 0.0
        %1022 = vmatpush1.msra.mxu0 0.0
        %1023 = vmatprep.subr.mxu0 0.0
        %1024 = vmatpush1.msra.mxu0 0.0
        %1025 = vmatprep.subr.mxu0 0.0
        %1026 = vmatpush1.msra.mxu0 0.0
        %1027 = vmatprep.subr.mxu0 0.0
        %1028 = vmatpush1.msra.mxu0 0.0
        %1029 = vmatprep.subr.mxu0 0.0
        %1030 = vmatpush1.msra.mxu0 0.0
        %1031 = vmatprep.subr.mxu0 0.0
        %1032 = vmatpush1.msra.mxu0 0.0
        %1033 = vmatprep.subr.mxu0 0.0
        %1034 = vmatpush1.msra.mxu0 0.0
        %1035 = vmatprep.subr.mxu0 0.0
        %1036 = vmatpush1.msra.mxu0 0.0
        %1037 = vmatprep.subr.mxu0 0.0
        %1038 = vmatpush1.msra.mxu0 0.0
        %1039 = vmatprep.subr.mxu0 0.0
        %1040 = vmatpush1.msra.mxu0 0.0
        %1041 = vmatprep.subr.mxu0 0.0
        %1042 = vmatpush1.msra.mxu0 0.0
        %1043 = vmatprep.subr.mxu0 0.0
        %1044 = vmatpush1.msra.mxu0 0.0
        %1045 = vmatprep.subr.mxu0 0.0
        %1046 = vmatpush1.msra.mxu0 0.0
        %1047 = vmatprep.subr.mxu0 0.0
        %1048 = vmatpush1.msra.mxu0 0.0
        %1049 = vmatprep.subr.mxu0 0.0
        %1050 = vmatpush1.msra.mxu0 0.0
        %1051 = vmatprep.subr.mxu0 0.0
        %1052 = vmatpush1.msra.mxu0 0.0
        %1053 = vmatprep.subr.mxu0 0.0
        %1054 = vmatpush1.msra.mxu0 0.0
        %1055 = vmatprep.subr.mxu0 0.0
        %1056 = vmatpush1.msra.mxu0 0.0
        %1057 = vmatprep.subr.mxu0 0.0
        %1058 = vmatpush1.msra.mxu0 0.0
        %1059 = vmatprep.subr.mxu0 0.0
        %1060 = vmatpush1.msra.mxu0 0.0
        %1061 = vmatprep.subr.mxu0 0.0
        %1062 = vmatpush1.msra.mxu0 0.0
        %1063 = vmatprep.subr.mxu0 0.0
        %1064 = vmatpush1.msra.mxu0 0.0
        %1065 = vmatprep.subr.mxu0 0.0
        %1066 = vmatpush1.msra.mxu0 0.0
        %1067 = vmatprep.subr.mxu0 0.0
        %1068 = vmatpush1.msra.mxu0 0.0
        %1069 = vmatprep.subr.mxu0 0.0
        %1070 = vmatpush1.msra.mxu0 0.0
        %1071 = vmatprep.subr.mxu0 0.0
        %1072 = vmatpush1.msra.mxu0 0.0
        %1073 = vmatprep.subr.mxu0 0.0
        %1074 = vmatpush1.msra.mxu0 0.0
        %1075 = vmatprep.subr.mxu0 0.0
        %1076 = vmatpush1.msra.mxu0 0.0
        %1077 = vmatprep.mubr.f32.mxu0 0.0
        %1078 = vmatmul.mubr.f32.gmra.mrb[0].mxu0 %v1011
        %v1079 = vpop.f32.mrb[0].mxu0
        %v1080 = vadd.f32 0.0, %v1079
        %v1081 = vpop.f32.mrb[0].mxu0
        %1082 = vdwg.mxu0
        %v1083 = vmul.f32 %v1080, 0.044194173
        %v1084 = vsel %vm617, %v1083, -inf
        %1085 = vmax.xlane.f32.xlu0 %v1084
        %v1086 = vpop.xlane.xlu0 %1085
        %v1087 = vsub.f32 %v1083, %v1086
        %v1088 = vmul.f32 %v1087, 1.442695
        %v1089 = vpow.pop %v1088
        %v1090 = vsel %vm617, %v1089, 0.0
        %1091 = vadd.xlane.f32.xlu0 %v1090
        %v1092 = vpop.xlane.xlu0 %1091
        %v1093 = vrcp.pop %v1092
        %v1094 = vmul.f32 %v1089, %v1093
        %s1095 = scalar_lea.vmem %s496, 8 [#allocation4]
        %1096 = vst.msk [vmem:[%s1095] sm:$0xff] %vm617, %v1094
        %v1099 = vsel %vm617, %v1094, 0
        %1101 = vmatprep.subr.mxu0 0.0
        %1102 = vmatpush1.msra.mxu0 %v962
        %1103 = vmatprep.subr.mxu0 0.0
        %1104 = vmatpush1.msra.mxu0 0.0
        %1105 = vmatprep.subr.mxu0 0.0
        %1106 = vmatpush1.msra.mxu0 0.0
        %1107 = vmatprep.subr.mxu0 0.0
        %1108 = vmatpush1.msra.mxu0 0.0
        %1109 = vmatprep.subr.mxu0 0.0
        %1110 = vmatpush1.msra.mxu0 0.0
        %1111 = vmatprep.subr.mxu0 0.0
        %1112 = vmatpush1.msra.mxu0 0.0
        %1113 = vmatprep.subr.mxu0 0.0
        %1114 = vmatpush1.msra.mxu0 0.0
        %1115 = vmatprep.subr.mxu0 0.0
        %1116 = vmatpush1.msra.mxu0 0.0
        %1117 = vmatprep.subr.mxu0 0.0
        %1118 = vmatpush1.msra.mxu0 0.0
        %1119 = vmatprep.subr.mxu0 0.0
        %1120 = vmatpush1.msra.mxu0 0.0
        %1121 = vmatprep.subr.mxu0 0.0
        %1122 = vmatpush1.msra.mxu0 0.0
        %1123 = vmatprep.subr.mxu0 0.0
        %1124 = vmatpush1.msra.mxu0 0.0
        %1125 = vmatprep.subr.mxu0 0.0
        %1126 = vmatpush1.msra.mxu0 0.0
        %1127 = vmatprep.subr.mxu0 0.0
        %1128 = vmatpush1.msra.mxu0 0.0
        %1129 = vmatprep.subr.mxu0 0.0
        %1130 = vmatpush1.msra.mxu0 0.0
        %1131 = vmatprep.subr.mxu0 0.0
        %1132 = vmatpush1.msra.mxu0 0.0
        %1133 = vmatprep.subr.mxu0 0.0
        %1134 = vmatpush1.msra.mxu0 0.0
        %1135 = vmatprep.subr.mxu0 0.0
        %1136 = vmatpush1.msra.mxu0 0.0
        %1137 = vmatprep.subr.mxu0 0.0
        %1138 = vmatpush1.msra.mxu0 0.0
        %1139 = vmatprep.subr.mxu0 0.0
        %1140 = vmatpush1.msra.mxu0 0.0
        %1141 = vmatprep.subr.mxu0 0.0
        %1142 = vmatpush1.msra.mxu0 0.0
        %1143 = vmatprep.subr.mxu0 0.0
        %1144 = vmatpush1.msra.mxu0 0.0
        %1145 = vmatprep.subr.mxu0 0.0
        %1146 = vmatpush1.msra.mxu0 0.0
        %1147 = vmatprep.subr.mxu0 0.0
        %1148 = vmatpush1.msra.mxu0 0.0
        %1149 = vmatprep.subr.mxu0 0.0
        %1150 = vmatpush1.msra.mxu0 0.0
        %1151 = vmatprep.subr.mxu0 0.0
        %1152 = vmatpush1.msra.mxu0 0.0
        %1153 = vmatprep.subr.mxu0 0.0
        %1154 = vmatpush1.msra.mxu0 0.0
        %1155 = vmatprep.subr.mxu0 0.0
        %1156 = vmatpush1.msra.mxu0 0.0
        %1157 = vmatprep.subr.mxu0 0.0
        %1158 = vmatpush1.msra.mxu0 0.0
        %1159 = vmatprep.subr.mxu0 0.0
        %1160 = vmatpush1.msra.mxu0 0.0
        %1161 = vmatprep.subr.mxu0 0.0
        %1162 = vmatpush1.msra.mxu0 0.0
        %1163 = vmatprep.subr.mxu0 0.0
        %1164 = vmatpush1.msra.mxu0 0.0
        %1165 = vmatprep.mubr.f32.mxu0 0.0
        %1166 = vmatmul.mubr.f32.gmra.mrb[0].mxu0 %v1099
        %v1167 = vpop.f32.mrb[0].mxu0
        %v1168 = vadd.f32 0.0, %v1167
        %v1169 = vpop.f32.mrb[0].mxu0
        %1170 = vdwg.mxu0
        %vm1171 = vcmask 195712
        %v1172 = vsel %vm1171, %v614, -inf
        %1173 = vmax.xlane.f32.xlu0 %v1172
        %v1174 = vpop.xlane.xlu0 %1173
        %v1175 = vsub.f32 %v614, %v1174
        %v1176 = vmul.f32 %v1175, 1.442695
        %v1177 = vpow.pop %v1176
        %1179 = vrot.lane.b32.xlu0 %v1177, 112
        %v1180 = vpop.permute.xlu0 %1179
        %v1182 = vsel %vm617, %v1180, 0.0
        %1183 = vadd.xlane.f32.xlu0 %v1182
        %v1184 = vpop.xlane.xlu0 %1183
        %v1185 = vrcp.pop %v1184
        %v1186 = vmul.f32 %v1177, %v1185
        %v1187 = vsel %vm1171, %v1186, 0.0
        %v1188 = vrot.slane %v1187, 4
        %v1189 = vadd.f32 %v1187, %v1188
        %v1190 = vrot.slane %v1189, 2
        %v1191 = vadd.f32 %v1189, %v1190
        %v1192 = vrot.slane %v1191, 1
        %v1193 = vadd.f32 %v1191, %v1192
        %s1194 = scalar_lea.vmem %s5, 128
        %v1195 = vld [vmem:[%s1194] sm:$0xff]
        %v1196 = vld [vmem:[%s1194 + $0x8] sm:$0xff]
        %v1197 = vld [vmem:[%s1194 + $0x10] sm:$0xff]
        %v1198 = vld [vmem:[%s1194 + $0x18] sm:$0xff]
        %v1199 = vld [vmem:[%s1194 + $0x20] sm:$0xff]
        %v1200 = vld [vmem:[%s1194 + $0x28] sm:$0xff]
        %v1201 = vld [vmem:[%s1194 + $0x30] sm:$0xff]
        %v1202 = vld [vmem:[%s1194 + $0x38] sm:$0xff]
        %1204 = vrot.lane.b32.xlu0 %v1193, 112
        %v1205 = vpop.permute.xlu0 %1204
        %v1207 = vmul.f32 %v1195, %v1205
        %v1208 = vmul.f32 %v1196, %v1205
        %v1209 = vmul.f32 %v1197, %v1205
        %v1210 = vmul.f32 %v1198, %v1205
        %v1211 = vmul.f32 %v1199, %v1205
        %v1212 = vmul.f32 %v1200, %v1205
        %v1213 = vmul.f32 %v1201, %v1205
        %v1214 = vmul.f32 %v1202, %v1205
        %v1215 = vsel %vm617, %v1207, 0.0
        %1216 = vadd.xlane.f32.xlu0 %v1215
        %v1217 = vpop.xlane.xlu0 %1216
        %v1218 = vsel %vm617, %v1208, 0.0
        %1219 = vadd.xlane.f32.xlu0 %v1218
        %v1220 = vpop.xlane.xlu0 %1219
        %v1221 = vsel %vm617, %v1209, 0.0
        %1222 = vadd.xlane.f32.xlu0 %v1221
        %v1223 = vpop.xlane.xlu0 %1222
        %v1224 = vsel %vm617, %v1210, 0.0
        %1225 = vadd.xlane.f32.xlu0 %v1224
        %v1226 = vpop.xlane.xlu0 %1225
        %v1227 = vsel %vm617, %v1211, 0.0
        %1228 = vadd.xlane.f32.xlu0 %v1227
        %v1229 = vpop.xlane.xlu0 %1228
        %v1230 = vsel %vm617, %v1212, 0.0
        %1231 = vadd.xlane.f32.xlu0 %v1230
        %v1232 = vpop.xlane.xlu0 %1231
        %v1233 = vsel %vm617, %v1213, 0.0
        %1234 = vadd.xlane.f32.xlu0 %v1233
        %v1235 = vpop.xlane.xlu0 %1234
        %v1236 = vsel %vm617, %v1214, 0.0
        %1237 = vadd.xlane.f32.xlu0 %v1236
        %v1238 = vpop.xlane.xlu0 %1237
        %1240 = vrot.lane.b32.xlu0 %v1186, 112
        %v1241 = vpop.permute.xlu0 %1240
        %v1250 = vlaneseq
        %v1251 = vshrl.u32 %v1250, 7
        %v1252 = vsub.s32 %v685, %v1251
        %v1253 = vrot.slane %v1217, %v1252
        %v1254 = vlaneseq
        %v1255 = vshrl.u32 %v1254, 7
        %v1256 = vsub.s32 %v685, %v1255
        %v1257 = vrot.slane %v1220, %v1256
        %v1258 = vlaneseq
        %v1259 = vshrl.u32 %v1258, 7
        %v1260 = vsub.s32 %v685, %v1259
        %v1261 = vrot.slane %v1223, %v1260
        %v1262 = vlaneseq
        %v1263 = vshrl.u32 %v1262, 7
        %v1264 = vsub.s32 %v685, %v1263
        %v1265 = vrot.slane %v1226, %v1264
        %v1266 = vlaneseq
        %v1267 = vshrl.u32 %v1266, 7
        %v1268 = vsub.s32 %v685, %v1267
        %v1269 = vrot.slane %v1229, %v1268
        %v1270 = vlaneseq
        %v1271 = vshrl.u32 %v1270, 7
        %v1272 = vsub.s32 %v685, %v1271
        %v1273 = vrot.slane %v1232, %v1272
        %v1274 = vlaneseq
        %v1275 = vshrl.u32 %v1274, 7
        %v1276 = vsub.s32 %v685, %v1275
        %v1277 = vrot.slane %v1235, %v1276
        %v1278 = vlaneseq
        %v1279 = vshrl.u32 %v1278, 7
        %v1280 = vsub.s32 %v685, %v1279
        %v1281 = vrot.slane %v1238, %v1280
        %v1282 = vsel %vm718, %v1257, %v1253
        %v1283 = vsel %vm720, %v1261, %v1282
        %v1284 = vsel %vm722, %v1265, %v1283
        %v1285 = vsel %vm724, %v1269, %v1284
        %v1286 = vsel %vm726, %v1273, %v1285
        %v1287 = vsel %vm728, %v1277, %v1286
        %v1288 = vsel %vm730, %v1281, %v1287
        %v1290 = vsel %vm617, %v1241, 0
        %1292 = vmatprep.subr.mxu0 0.0
        %1293 = vmatpush1.msra.mxu0 %v1288
        %1294 = vmatprep.subr.mxu0 0.0
        %1295 = vmatpush1.msra.mxu0 0.0
        %1296 = vmatprep.subr.mxu0 0.0
        %1297 = vmatpush1.msra.mxu0 0.0
        %1298 = vmatprep.subr.mxu0 0.0
        %1299 = vmatpush1.msra.mxu0 0.0
        %1300 = vmatprep.subr.mxu0 0.0
        %1301 = vmatpush1.msra.mxu0 0.0
        %1302 = vmatprep.subr.mxu0 0.0
        %1303 = vmatpush1.msra.mxu0 0.0
        %1304 = vmatprep.subr.mxu0 0.0
        %1305 = vmatpush1.msra.mxu0 0.0
        %1306 = vmatprep.subr.mxu0 0.0
        %1307 = vmatpush1.msra.mxu0 0.0
        %1308 = vmatprep.subr.mxu0 0.0
        %1309 = vmatpush1.msra.mxu0 0.0
        %1310 = vmatprep.subr.mxu0 0.0
        %1311 = vmatpush1.msra.mxu0 0.0
        %1312 = vmatprep.subr.mxu0 0.0
        %1313 = vmatpush1.msra.mxu0 0.0
        %1314 = vmatprep.subr.mxu0 0.0
        %1315 = vmatpush1.msra.mxu0 0.0
        %1316 = vmatprep.subr.mxu0 0.0
        %1317 = vmatpush1.msra.mxu0 0.0
        %1318 = vmatprep.subr.mxu0 0.0
        %1319 = vmatpush1.msra.mxu0 0.0
        %1320 = vmatprep.subr.mxu0 0.0
        %1321 = vmatpush1.msra.mxu0 0.0
        %1322 = vmatprep.subr.mxu0 0.0
        %1323 = vmatpush1.msra.mxu0 0.0
        %1324 = vmatprep.subr.mxu0 0.0
        %1325 = vmatpush1.msra.mxu0 0.0
        %1326 = vmatprep.subr.mxu0 0.0
        %1327 = vmatpush1.msra.mxu0 0.0
        %1328 = vmatprep.subr.mxu0 0.0
        %1329 = vmatpush1.msra.mxu0 0.0
        %1330 = vmatprep.subr.mxu0 0.0
        %1331 = vmatpush1.msra.mxu0 0.0
        %1332 = vmatprep.subr.mxu0 0.0
        %1333 = vmatpush1.msra.mxu0 0.0
        %1334 = vmatprep.subr.mxu0 0.0
        %1335 = vmatpush1.msra.mxu0 0.0
        %1336 = vmatprep.subr.mxu0 0.0
        %1337 = vmatpush1.msra.mxu0 0.0
        %1338 = vmatprep.subr.mxu0 0.0
        %1339 = vmatpush1.msra.mxu0 0.0
        %1340 = vmatprep.subr.mxu0 0.0
        %1341 = vmatpush1.msra.mxu0 0.0
        %1342 = vmatprep.subr.mxu0 0.0
        %1343 = vmatpush1.msra.mxu0 0.0
        %1344 = vmatprep.subr.mxu0 0.0
        %1345 = vmatpush1.msra.mxu0 0.0
        %1346 = vmatprep.subr.mxu0 0.0
        %1347 = vmatpush1.msra.mxu0 0.0
        %1348 = vmatprep.subr.mxu0 0.0
        %1349 = vmatpush1.msra.mxu0 0.0
        %1350 = vmatprep.subr.mxu0 0.0
        %1351 = vmatpush1.msra.mxu0 0.0
        %1352 = vmatprep.subr.mxu0 0.0
        %1353 = vmatpush1.msra.mxu0 0.0
        %1354 = vmatprep.subr.mxu0 0.0
        %1355 = vmatpush1.msra.mxu0 0.0
        %1356 = vmatprep.mubr.f32.mxu0 0.0
        %1357 = vmatmul.mubr.f32.gmra.mrb[0].mxu0 %v1290
        %v1358 = vpop.f32.mrb[0].mxu0
        %v1359 = vadd.f32 0.0, %v1358
        %v1360 = vpop.f32.mrb[0].mxu0
        %1361 = vdwg.mxu0
        %v1362 = vmul.f32 %v1359, 0.044194173
        %v1363 = vsel %vm617, %v1362, -inf
        %1364 = vmax.xlane.f32.xlu0 %v1363
        %v1365 = vpop.xlane.xlu0 %1364
        %v1366 = vsub.f32 %v1362, %v1365
        %v1367 = vmul.f32 %v1366, 1.442695
        %v1368 = vpow.pop %v1367
        %v1369 = vsel %vm617, %v1368, 0.0
        %1370 = vadd.xlane.f32.xlu0 %v1369
        %v1371 = vpop.xlane.xlu0 %1370
        %v1372 = vrcp.pop %v1371
        %v1373 = vmul.f32 %v1368, %v1372
        %s1374 = scalar_lea.vmem %s496, 16 [#allocation4]
        %1375 = vst.msk [vmem:[%s1374] sm:$0xff] %vm617, %v1373
        %v1378 = vsel %vm617, %v1373, 0
        %1380 = vmatprep.subr.mxu0 0.0
        %1381 = vmatpush1.msra.mxu0 %v1241
        %1382 = vmatprep.subr.mxu0 0.0
        %1383 = vmatpush1.msra.mxu0 0.0
        %1384 = vmatprep.subr.mxu0 0.0
        %1385 = vmatpush1.msra.mxu0 0.0
        %1386 = vmatprep.subr.mxu0 0.0
        %1387 = vmatpush1.msra.mxu0 0.0
        %1388 = vmatprep.subr.mxu0 0.0
        %1389 = vmatpush1.msra.mxu0 0.0
        %1390 = vmatprep.subr.mxu0 0.0
        %1391 = vmatpush1.msra.mxu0 0.0
        %1392 = vmatprep.subr.mxu0 0.0
        %1393 = vmatpush1.msra.mxu0 0.0
        %1394 = vmatprep.subr.mxu0 0.0
        %1395 = vmatpush1.msra.mxu0 0.0
        %1396 = vmatprep.subr.mxu0 0.0
        %1397 = vmatpush1.msra.mxu0 0.0
        %1398 = vmatprep.subr.mxu0 0.0
        %1399 = vmatpush1.msra.mxu0 0.0
        %1400 = vmatprep.subr.mxu0 0.0
        %1401 = vmatpush1.msra.mxu0 0.0
        %1402 = vmatprep.subr.mxu0 0.0
        %1403 = vmatpush1.msra.mxu0 0.0
        %1404 = vmatprep.subr.mxu0 0.0
        %1405 = vmatpush1.msra.mxu0 0.0
        %1406 = vmatprep.subr.mxu0 0.0
        %1407 = vmatpush1.msra.mxu0 0.0
        %1408 = vmatprep.subr.mxu0 0.0
        %1409 = vmatpush1.msra.mxu0 0.0
        %1410 = vmatprep.subr.mxu0 0.0
        %1411 = vmatpush1.msra.mxu0 0.0
        %1412 = vmatprep.subr.mxu0 0.0
        %1413 = vmatpush1.msra.mxu0 0.0
        %1414 = vmatprep.subr.mxu0 0.0
        %1415 = vmatpush1.msra.mxu0 0.0
        %1416 = vmatprep.subr.mxu0 0.0
        %1417 = vmatpush1.msra.mxu0 0.0
        %1418 = vmatprep.subr.mxu0 0.0
        %1419 = vmatpush1.msra.mxu0 0.0
        %1420 = vmatprep.subr.mxu0 0.0
        %1421 = vmatpush1.msra.mxu0 0.0
        %1422 = vmatprep.subr.mxu0 0.0
        %1423 = vmatpush1.msra.mxu0 0.0
        %1424 = vmatprep.subr.mxu0 0.0
        %1425 = vmatpush1.msra.mxu0 0.0
        %1426 = vmatprep.subr.mxu0 0.0
        %1427 = vmatpush1.msra.mxu0 0.0
        %1428 = vmatprep.subr.mxu0 0.0
        %1429 = vmatpush1.msra.mxu0 0.0
        %1430 = vmatprep.subr.mxu0 0.0
        %1431 = vmatpush1.msra.mxu0 0.0
        %1432 = vmatprep.subr.mxu0 0.0
        %1433 = vmatpush1.msra.mxu0 0.0
        %1434 = vmatprep.subr.mxu0 0.0
        %1435 = vmatpush1.msra.mxu0 0.0
        %1436 = vmatprep.subr.mxu0 0.0
        %1437 = vmatpush1.msra.mxu0 0.0
        %1438 = vmatprep.subr.mxu0 0.0
        %1439 = vmatpush1.msra.mxu0 0.0
        %1440 = vmatprep.subr.mxu0 0.0
        %1441 = vmatpush1.msra.mxu0 0.0
        %1442 = vmatprep.subr.mxu0 0.0
        %1443 = vmatpush1.msra.mxu0 0.0
        %1444 = vmatprep.mubr.f32.mxu0 0.0
        %1445 = vmatmul.mubr.f32.gmra.mrb[0].mxu0 %v1378
        %v1446 = vpop.f32.mrb[0].mxu0
        %v1447 = vadd.f32 0.0, %v1446
        %v1448 = vpop.f32.mrb[0].mxu0
        %1449 = vdwg.mxu0
        %vm1450 = vcmask 261312
        %v1451 = vsel %vm1450, %v614, -inf
        %1452 = vmax.xlane.f32.xlu0 %v1451
        %v1453 = vpop.xlane.xlu0 %1452
        %v1454 = vsub.f32 %v614, %v1453
        %v1455 = vmul.f32 %v1454, 1.442695
        %v1456 = vpow.pop %v1455
        %1458 = vrot.lane.b32.xlu0 %v1456, 104
        %v1459 = vpop.permute.xlu0 %1458
        %v1461 = vsel %vm617, %v1459, 0.0
        %1462 = vadd.xlane.f32.xlu0 %v1461
        %v1463 = vpop.xlane.xlu0 %1462
        %v1464 = vrcp.pop %v1463
        %v1465 = vmul.f32 %v1456, %v1464
        %v1466 = vsel %vm1450, %v1465, 0.0
        %v1467 = vrot.slane %v1466, 4
        %v1468 = vadd.f32 %v1466, %v1467
        %v1469 = vrot.slane %v1468, 2
        %v1470 = vadd.f32 %v1468, %v1469
        %v1471 = vrot.slane %v1470, 1
        %v1472 = vadd.f32 %v1470, %v1471
        %s1473 = scalar_lea.vmem %s5, 192
        %v1474 = vld [vmem:[%s1473] sm:$0xff]
        %v1475 = vld [vmem:[%s1473 + $0x8] sm:$0xff]
        %v1476 = vld [vmem:[%s1473 + $0x10] sm:$0xff]
        %v1477 = vld [vmem:[%s1473 + $0x18] sm:$0xff]
        %v1478 = vld [vmem:[%s1473 + $0x20] sm:$0xff]
        %v1479 = vld [vmem:[%s1473 + $0x28] sm:$0xff]
        %v1480 = vld [vmem:[%s1473 + $0x30] sm:$0xff]
        %v1481 = vld [vmem:[%s1473 + $0x38] sm:$0xff]
        %1483 = vrot.lane.b32.xlu0 %v1472, 104
        %v1484 = vpop.permute.xlu0 %1483
        %v1486 = vmul.f32 %v1474, %v1484
        %v1487 = vmul.f32 %v1475, %v1484
        %v1488 = vmul.f32 %v1476, %v1484
        %v1489 = vmul.f32 %v1477, %v1484
        %v1490 = vmul.f32 %v1478, %v1484
        %v1491 = vmul.f32 %v1479, %v1484
        %v1492 = vmul.f32 %v1480, %v1484
        %v1493 = vmul.f32 %v1481, %v1484
        %v1494 = vsel %vm617, %v1486, 0.0
        %1495 = vadd.xlane.f32.xlu0 %v1494
        %v1496 = vpop.xlane.xlu0 %1495
        %v1497 = vsel %vm617, %v1487, 0.0
        %1498 = vadd.xlane.f32.xlu0 %v1497
        %v1499 = vpop.xlane.xlu0 %1498
        %v1500 = vsel %vm617, %v1488, 0.0
        %1501 = vadd.xlane.f32.xlu0 %v1500
        %v1502 = vpop.xlane.xlu0 %1501
        %v1503 = vsel %vm617, %v1489, 0.0
        %1504 = vadd.xlane.f32.xlu0 %v1503
        %v1505 = vpop.xlane.xlu0 %1504
        %v1506 = vsel %vm617, %v1490, 0.0
        %1507 = vadd.xlane.f32.xlu0 %v1506
        %v1508 = vpop.xlane.xlu0 %1507
        %v1509 = vsel %vm617, %v1491, 0.0
        %1510 = vadd.xlane.f32.xlu0 %v1509
        %v1511 = vpop.xlane.xlu0 %1510
        %v1512 = vsel %vm617, %v1492, 0.0
        %1513 = vadd.xlane.f32.xlu0 %v1512
        %v1514 = vpop.xlane.xlu0 %1513
        %v1515 = vsel %vm617, %v1493, 0.0
        %1516 = vadd.xlane.f32.xlu0 %v1515
        %v1517 = vpop.xlane.xlu0 %1516
        %1519 = vrot.lane.b32.xlu0 %v1465, 104
        %v1520 = vpop.permute.xlu0 %1519
        %v1529 = vlaneseq
        %v1530 = vshrl.u32 %v1529, 7
        %v1531 = vsub.s32 %v685, %v1530
        %v1532 = vrot.slane %v1496, %v1531
        %v1533 = vlaneseq
        %v1534 = vshrl.u32 %v1533, 7
        %v1535 = vsub.s32 %v685, %v1534
        %v1536 = vrot.slane %v1499, %v1535
        %v1537 = vlaneseq
        %v1538 = vshrl.u32 %v1537, 7
        %v1539 = vsub.s32 %v685, %v1538
        %v1540 = vrot.slane %v1502, %v1539
        %v1541 = vlaneseq
        %v1542 = vshrl.u32 %v1541, 7
        %v1543 = vsub.s32 %v685, %v1542
        %v1544 = vrot.slane %v1505, %v1543
        %v1545 = vlaneseq
        %v1546 = vshrl.u32 %v1545, 7
        %v1547 = vsub.s32 %v685, %v1546
        %v1548 = vrot.slane %v1508, %v1547
        %v1549 = vlaneseq
        %v1550 = vshrl.u32 %v1549, 7
        %v1551 = vsub.s32 %v685, %v1550
        %v1552 = vrot.slane %v1511, %v1551
        %v1553 = vlaneseq
        %v1554 = vshrl.u32 %v1553, 7
        %v1555 = vsub.s32 %v685, %v1554
        %v1556 = vrot.slane %v1514, %v1555
        %v1557 = vlaneseq
        %v1558 = vshrl.u32 %v1557, 7
        %v1559 = vsub.s32 %v685, %v1558
        %v1560 = vrot.slane %v1517, %v1559
        %v1561 = vsel %vm718, %v1536, %v1532
        %v1562 = vsel %vm720, %v1540, %v1561
        %v1563 = vsel %vm722, %v1544, %v1562
        %v1564 = vsel %vm724, %v1548, %v1563
        %v1565 = vsel %vm726, %v1552, %v1564
        %v1566 = vsel %vm728, %v1556, %v1565
        %v1567 = vsel %vm730, %v1560, %v1566
        %v1569 = vsel %vm617, %v1520, 0
        %1571 = vmatprep.subr.mxu0 0.0
        %1572 = vmatpush1.msra.mxu0 %v1567
        %1573 = vmatprep.subr.mxu0 0.0
        %1574 = vmatpush1.msra.mxu0 0.0
        %1575 = vmatprep.subr.mxu0 0.0
        %1576 = vmatpush1.msra.mxu0 0.0
        %1577 = vmatprep.subr.mxu0 0.0
        %1578 = vmatpush1.msra.mxu0 0.0
        %1579 = vmatprep.subr.mxu0 0.0
        %1580 = vmatpush1.msra.mxu0 0.0
        %1581 = vmatprep.subr.mxu0 0.0
        %1582 = vmatpush1.msra.mxu0 0.0
        %1583 = vmatprep.subr.mxu0 0.0
        %1584 = vmatpush1.msra.mxu0 0.0
        %1585 = vmatprep.subr.mxu0 0.0
        %1586 = vmatpush1.msra.mxu0 0.0
        %1587 = vmatprep.subr.mxu0 0.0
        %1588 = vmatpush1.msra.mxu0 0.0
        %1589 = vmatprep.subr.mxu0 0.0
        %1590 = vmatpush1.msra.mxu0 0.0
        %1591 = vmatprep.subr.mxu0 0.0
        %1592 = vmatpush1.msra.mxu0 0.0
        %1593 = vmatprep.subr.mxu0 0.0
        %1594 = vmatpush1.msra.mxu0 0.0
        %1595 = vmatprep.subr.mxu0 0.0
        %1596 = vmatpush1.msra.mxu0 0.0
        %1597 = vmatprep.subr.mxu0 0.0
        %1598 = vmatpush1.msra.mxu0 0.0
        %1599 = vmatprep.subr.mxu0 0.0
        %1600 = vmatpush1.msra.mxu0 0.0
        %1601 = vmatprep.subr.mxu0 0.0
        %1602 = vmatpush1.msra.mxu0 0.0
        %1603 = vmatprep.subr.mxu0 0.0
        %1604 = vmatpush1.msra.mxu0 0.0
        %1605 = vmatprep.subr.mxu0 0.0
        %1606 = vmatpush1.msra.mxu0 0.0
        %1607 = vmatprep.subr.mxu0 0.0
        %1608 = vmatpush1.msra.mxu0 0.0
        %1609 = vmatprep.subr.mxu0 0.0
        %1610 = vmatpush1.msra.mxu0 0.0
        %1611 = vmatprep.subr.mxu0 0.0
        %1612 = vmatpush1.msra.mxu0 0.0
        %1613 = vmatprep.subr.mxu0 0.0
        %1614 = vmatpush1.msra.mxu0 0.0
        %1615 = vmatprep.subr.mxu0 0.0
        %1616 = vmatpush1.msra.mxu0 0.0
        %1617 = vmatprep.subr.mxu0 0.0
        %1618 = vmatpush1.msra.mxu0 0.0
        %1619 = vmatprep.subr.mxu0 0.0
        %1620 = vmatpush1.msra.mxu0 0.0
        %1621 = vmatprep.subr.mxu0 0.0
        %1622 = vmatpush1.msra.mxu0 0.0
        %1623 = vmatprep.subr.mxu0 0.0
        %1624 = vmatpush1.msra.mxu0 0.0
        %1625 = vmatprep.subr.mxu0 0.0
        %1626 = vmatpush1.msra.mxu0 0.0
        %1627 = vmatprep.subr.mxu0 0.0
        %1628 = vmatpush1.msra.mxu0 0.0
        %1629 = vmatprep.subr.mxu0 0.0
        %1630 = vmatpush1.msra.mxu0 0.0
        %1631 = vmatprep.subr.mxu0 0.0
        %1632 = vmatpush1.msra.mxu0 0.0
        %1633 = vmatprep.subr.mxu0 0.0
        %1634 = vmatpush1.msra.mxu0 0.0
        %1635 = vmatprep.mubr.f32.mxu0 0.0
        %1636 = vmatmul.mubr.f32.gmra.mrb[0].mxu0 %v1569
        %v1637 = vpop.f32.mrb[0].mxu0
        %v1638 = vadd.f32 0.0, %v1637
        %v1639 = vpop.f32.mrb[0].mxu0
        %1640 = vdwg.mxu0
        %v1641 = vmul.f32 %v1638, 0.044194173
        %v1642 = vsel %vm617, %v1641, -inf
        %1643 = vmax.xlane.f32.xlu0 %v1642
        %v1644 = vpop.xlane.xlu0 %1643
        %v1645 = vsub.f32 %v1641, %v1644
        %v1646 = vmul.f32 %v1645, 1.442695
        %v1647 = vpow.pop %v1646
        %v1648 = vsel %vm617, %v1647, 0.0
        %1649 = vadd.xlane.f32.xlu0 %v1648
        %v1650 = vpop.xlane.xlu0 %1649
        %v1651 = vrcp.pop %v1650
        %v1652 = vmul.f32 %v1647, %v1651
        %s1653 = scalar_lea.vmem %s496, 24 [#allocation4]
        %1654 = vst.msk [vmem:[%s1653] sm:$0xff] %vm617, %v1652
        %v1657 = vsel %vm617, %v1652, 0
        %1659 = vmatprep.subr.mxu0 0.0
        %1660 = vmatpush1.msra.mxu0 %v1520
        %1661 = vmatprep.subr.mxu0 0.0
        %1662 = vmatpush1.msra.mxu0 0.0
        %1663 = vmatprep.subr.mxu0 0.0
        %1664 = vmatpush1.msra.mxu0 0.0
        %1665 = vmatprep.subr.mxu0 0.0
        %1666 = vmatpush1.msra.mxu0 0.0
        %1667 = vmatprep.subr.mxu0 0.0
        %1668 = vmatpush1.msra.mxu0 0.0
        %1669 = vmatprep.subr.mxu0 0.0
        %1670 = vmatpush1.msra.mxu0 0.0
        %1671 = vmatprep.subr.mxu0 0.0
        %1672 = vmatpush1.msra.mxu0 0.0
        %1673 = vmatprep.subr.mxu0 0.0
        %1674 = vmatpush1.msra.mxu0 0.0
        %1675 = vmatprep.subr.mxu0 0.0
        %1676 = vmatpush1.msra.mxu0 0.0
        %1677 = vmatprep.subr.mxu0 0.0
        %1678 = vmatpush1.msra.mxu0 0.0
        %1679 = vmatprep.subr.mxu0 0.0
        %1680 = vmatpush1.msra.mxu0 0.0
        %1681 = vmatprep.subr.mxu0 0.0
        %1682 = vmatpush1.msra.mxu0 0.0
        %1683 = vmatprep.subr.mxu0 0.0
        %1684 = vmatpush1.msra.mxu0 0.0
        %1685 = vmatprep.subr.mxu0 0.0
        %1686 = vmatpush1.msra.mxu0 0.0
        %1687 = vmatprep.subr.mxu0 0.0
        %1688 = vmatpush1.msra.mxu0 0.0
        %1689 = vmatprep.subr.mxu0 0.0
        %1690 = vmatpush1.msra.mxu0 0.0
        %1691 = vmatprep.subr.mxu0 0.0
        %1692 = vmatpush1.msra.mxu0 0.0
        %1693 = vmatprep.subr.mxu0 0.0
        %1694 = vmatpush1.msra.mxu0 0.0
        %1695 = vmatprep.subr.mxu0 0.0
        %1696 = vmatpush1.msra.mxu0 0.0
        %1697 = vmatprep.subr.mxu0 0.0
        %1698 = vmatpush1.msra.mxu0 0.0
        %1699 = vmatprep.subr.mxu0 0.0
        %1700 = vmatpush1.msra.mxu0 0.0
        %1701 = vmatprep.subr.mxu0 0.0
        %1702 = vmatpush1.msra.mxu0 0.0
        %1703 = vmatprep.subr.mxu0 0.0
        %1704 = vmatpush1.msra.mxu0 0.0
        %1705 = vmatprep.subr.mxu0 0.0
        %1706 = vmatpush1.msra.mxu0 0.0
        %1707 = vmatprep.subr.mxu0 0.0
        %1708 = vmatpush1.msra.mxu0 0.0
        %1709 = vmatprep.subr.mxu0 0.0
        %1710 = vmatpush1.msra.mxu0 0.0
        %1711 = vmatprep.subr.mxu0 0.0
        %1712 = vmatpush1.msra.mxu0 0.0
        %1713 = vmatprep.subr.mxu0 0.0
        %1714 = vmatpush1.msra.mxu0 0.0
        %1715 = vmatprep.subr.mxu0 0.0
        %1716 = vmatpush1.msra.mxu0 0.0
        %1717 = vmatprep.subr.mxu0 0.0
        %1718 = vmatpush1.msra.mxu0 0.0
        %1719 = vmatprep.subr.mxu0 0.0
        %1720 = vmatpush1.msra.mxu0 0.0
        %1721 = vmatprep.subr.mxu0 0.0
        %1722 = vmatpush1.msra.mxu0 0.0
        %1723 = vmatprep.mubr.f32.mxu0 0.0
        %1724 = vmatmul.mubr.f32.gmra.mrb[0].mxu0 %v1657
        %v1725 = vpop.f32.mrb[0].mxu0
        %v1726 = vadd.f32 0.0, %v1725
        %v1727 = vpop.f32.mrb[0].mxu0
        %1728 = vdwg.mxu0
        %1730 = vrot.lane.b32.xlu0 %v1168, 8
        %v1731 = vpop.permute.xlu0 %1730
        %1734 = vrot.lane.b32.xlu0 %v1447, 16
        %v1735 = vpop.permute.xlu0 %1734
        %1738 = vrot.lane.b32.xlu0 %v1726, 24
        %v1739 = vpop.permute.xlu0 %1738
        %v1741 = vsel %vm617, %v889, %v1731
        %vm1742 = vcmask 130048
        %v1743 = vsel %vm1742, %v1741, %v1735
        %vm1744 = vcmask 195584
        %v1745 = vsel %vm1744, %v1743, %v1739
        %v1746 = vld [vmem:[%s6] sm:$0xff]
        %v1747 = vld [vmem:[%s6 + $0x8] sm:$0xff]
        %v1748 = vld [vmem:[%s6 + $0x10] sm:$0xff]
        %v1749 = vld [vmem:[%s6 + $0x18] sm:$0xff]
        %v1750 = vld [vmem:[%s7] sm:$0x1]
        %v1752 = vlaneseq
        %v1753 = vshrl.u32 %v1752, 7
        %v1754 = vsub.s32 0, %v1753
        %v1755 = vrot.slane %v1750, %v1754
        %v1758 = vsel %vm502, %v1745, 0
        %1760 = vmatprep.subr.mxu0 0.0
        %1761 = vmatpush1.msra.mxu0 %v1746
        %1762 = vmatprep.subr.mxu0 0.0
        %1763 = vmatpush1.msra.mxu0 %v1747
        %1764 = vmatprep.subr.mxu0 0.0
        %1765 = vmatpush1.msra.mxu0 %v1748
        %1766 = vmatprep.subr.mxu0 0.0
        %1767 = vmatpush1.msra.mxu0 %v1749
        %1768 = vmatprep.subr.mxu0 0.0
        %1769 = vmatpush1.msra.mxu0 0.0
        %1770 = vmatprep.subr.mxu0 0.0
        %1771 = vmatpush1.msra.mxu0 0.0
        %1772 = vmatprep.subr.mxu0 0.0
        %1773 = vmatpush1.msra.mxu0 0.0
        %1774 = vmatprep.subr.mxu0 0.0
        %1775 = vmatpush1.msra.mxu0 0.0
        %1776 = vmatprep.subr.mxu0 0.0
        %1777 = vmatpush1.msra.mxu0 0.0
        %1778 = vmatprep.subr.mxu0 0.0
        %1779 = vmatpush1.msra.mxu0 0.0
        %1780 = vmatprep.subr.mxu0 0.0
        %1781 = vmatpush1.msra.mxu0 0.0
        %1782 = vmatprep.subr.mxu0 0.0
        %1783 = vmatpush1.msra.mxu0 0.0
        %1784 = vmatprep.subr.mxu0 0.0
        %1785 = vmatpush1.msra.mxu0 0.0
        %1786 = vmatprep.subr.mxu0 0.0
        %1787 = vmatpush1.msra.mxu0 0.0
        %1788 = vmatprep.subr.mxu0 0.0
        %1789 = vmatpush1.msra.mxu0 0.0
        %1790 = vmatprep.subr.mxu0 0.0
        %1791 = vmatpush1.msra.mxu0 0.0
        %1792 = vmatprep.subr.mxu0 0.0
        %1793 = vmatpush1.msra.mxu0 0.0
        %1794 = vmatprep.subr.mxu0 0.0
        %1795 = vmatpush1.msra.mxu0 0.0
        %1796 = vmatprep.subr.mxu0 0.0
        %1797 = vmatpush1.msra.mxu0 0.0
        %1798 = vmatprep.subr.mxu0 0.0
        %1799 = vmatpush1.msra.mxu0 0.0
        %1800 = vmatprep.subr.mxu0 0.0
        %1801 = vmatpush1.msra.mxu0 0.0
        %1802 = vmatprep.subr.mxu0 0.0
        %1803 = vmatpush1.msra.mxu0 0.0
        %1804 = vmatprep.subr.mxu0 0.0
        %1805 = vmatpush1.msra.mxu0 0.0
        %1806 = vmatprep.subr.mxu0 0.0
        %1807 = vmatpush1.msra.mxu0 0.0
        %1808 = vmatprep.subr.mxu0 0.0
        %1809 = vmatpush1.msra.mxu0 0.0
        %1810 = vmatprep.subr.mxu0 0.0
        %1811 = vmatpush1.msra.mxu0 0.0
        %1812 = vmatprep.subr.mxu0 0.0
        %1813 = vmatpush1.msra.mxu0 0.0
        %1814 = vmatprep.subr.mxu0 0.0
        %1815 = vmatpush1.msra.mxu0 0.0
        %1816 = vmatprep.subr.mxu0 0.0
        %1817 = vmatpush1.msra.mxu0 0.0
        %1818 = vmatprep.subr.mxu0 0.0
        %1819 = vmatpush1.msra.mxu0 0.0
        %1820 = vmatprep.subr.mxu0 0.0
        %1821 = vmatpush1.msra.mxu0 0.0
        %1822 = vmatprep.subr.mxu0 0.0
        %1823 = vmatpush1.msra.mxu0 0.0
        %1824 = vmatprep.mubr.f32.mxu0 0.0
        %1825 = vmatmul.mubr.f32.gmra.mrb[0].mxu0 %v1758
        %v1826 = vpop.f32.mrb[0].mxu0
        %v1827 = vadd.f32 %v1755, %v1826
        %v1828 = vpop.f32.mrb[0].mxu0
        %1829 = vdwg.mxu0
        %v1830 = vadd.f32 %v1827, %v501
        %v1831 = vsel %vm502, %v1830, 0.0
        %1832 = vadd.xlane.f32.xlu0 %v1831
        %v1833 = vpop.xlane.xlu0 %1832
        %v1834 = vmul.f32 %v1833, %v506
        %v1835 = vsub.f32 %v1830, %v1834
        %v1836 = vmul.f32 %v1835, %v1835
        %v1837 = vsel %vm502, %v1836, 0.0
        %1838 = vadd.xlane.f32.xlu0 %v1837
        %v1839 = vpop.xlane.xlu0 %1838
        %v1840 = vmul.f32 %v1839, %v506
        %v1841 = vadd.f32 %v1840, 1e-05
        %v1842 = vrsqrt.pop %v1841
        %v1843 = vmul.f32 %v1835, %v1842
        %v1844 = vld [vmem:[%s8] sm:$0x1]
        %v1846 = vlaneseq
        %v1847 = vshrl.u32 %v1846, 7
        %v1848 = vsub.s32 0, %v1847
        %v1849 = vrot.slane %v1844, %v1848
        %v1851 = vmul.f32 %v1843, %v1849
        %v1852 = vld [vmem:[%s9] sm:$0x1]
        %v1854 = vlaneseq
        %v1855 = vshrl.u32 %v1854, 7
        %v1856 = vsub.s32 0, %v1855
        %v1857 = vrot.slane %v1852, %v1856
        %v1859 = vadd.f32 %v1851, %v1857
        %v1860 = vld [vmem:[%s10] sm:$0xff]
        %v1861 = vld [vmem:[%s10 + $0x8] sm:$0xff]
        %v1862 = vld [vmem:[%s10 + $0x10] sm:$0xff]
        %v1863 = vld [vmem:[%s10 + $0x18] sm:$0xff]
        %v1864 = vld [vmem:[%s11] sm:$0x1]
        %v1866 = vlaneseq
        %v1867 = vshrl.u32 %v1866, 7
        %v1868 = vsub.s32 0, %v1867
        %v1869 = vrot.slane %v1864, %v1868
        %v1872 = vsel %vm502, %v1859, 0
        %1874 = vmatprep.subr.mxu0 0.0
        %1875 = vmatpush1.msra.mxu0 %v1860
        %1876 = vmatprep.subr.mxu0 0.0
        %1877 = vmatpush1.msra.mxu0 %v1861
        %1878 = vmatprep.subr.mxu0 0.0
        %1879 = vmatpush1.msra.mxu0 %v1862
        %1880 = vmatprep.subr.mxu0 0.0
        %1881 = vmatpush1.msra.mxu0 %v1863
        %1882 = vmatprep.subr.mxu0 0.0
        %1883 = vmatpush1.msra.mxu0 0.0
        %1884 = vmatprep.subr.mxu0 0.0
        %1885 = vmatpush1.msra.mxu0 0.0
        %1886 = vmatprep.subr.mxu0 0.0
        %1887 = vmatpush1.msra.mxu0 0.0
        %1888 = vmatprep.subr.mxu0 0.0
        %1889 = vmatpush1.msra.mxu0 0.0
        %1890 = vmatprep.subr.mxu0 0.0
        %1891 = vmatpush1.msra.mxu0 0.0
        %1892 = vmatprep.subr.mxu0 0.0
        %1893 = vmatpush1.msra.mxu0 0.0
        %1894 = vmatprep.subr.mxu0 0.0
        %1895 = vmatpush1.msra.mxu0 0.0
        %1896 = vmatprep.subr.mxu0 0.0
        %1897 = vmatpush1.msra.mxu0 0.0
        %1898 = vmatprep.subr.mxu0 0.0
        %1899 = vmatpush1.msra.mxu0 0.0
        %1900 = vmatprep.subr.mxu0 0.0
        %1901 = vmatpush1.msra.mxu0 0.0
        %1902 = vmatprep.subr.mxu0 0.0
        %1903 = vmatpush1.msra.mxu0 0.0
        %1904 = vmatprep.subr.mxu0 0.0
        %1905 = vmatpush1.msra.mxu0 0.0
        %1906 = vmatprep.subr.mxu0 0.0
        %1907 = vmatpush1.msra.mxu0 0.0
        %1908 = vmatprep.subr.mxu0 0.0
        %1909 = vmatpush1.msra.mxu0 0.0
        %1910 = vmatprep.subr.mxu0 0.0
        %1911 = vmatpush1.msra.mxu0 0.0
        %1912 = vmatprep.subr.mxu0 0.0
        %1913 = vmatpush1.msra.mxu0 0.0
        %1914 = vmatprep.subr.mxu0 0.0
        %1915 = vmatpush1.msra.mxu0 0.0
        %1916 = vmatprep.subr.mxu0 0.0
        %1917 = vmatpush1.msra.mxu0 0.0
        %1918 = vmatprep.subr.mxu0 0.0
        %1919 = vmatpush1.msra.mxu0 0.0
        %1920 = vmatprep.subr.mxu0 0.0
        %1921 = vmatpush1.msra.mxu0 0.0
        %1922 = vmatprep.subr.mxu0 0.0
        %1923 = vmatpush1.msra.mxu0 0.0
        %1924 = vmatprep.subr.mxu0 0.0
        %1925 = vmatpush1.msra.mxu0 0.0
        %1926 = vmatprep.subr.mxu0 0.0
        %1927 = vmatpush1.msra.mxu0 0.0
        %1928 = vmatprep.subr.mxu0 0.0
        %1929 = vmatpush1.msra.mxu0 0.0
        %1930 = vmatprep.subr.mxu0 0.0
        %1931 = vmatpush1.msra.mxu0 0.0
        %1932 = vmatprep.subr.mxu0 0.0
        %1933 = vmatpush1.msra.mxu0 0.0
        %1934 = vmatprep.subr.mxu0 0.0
        %1935 = vmatpush1.msra.mxu0 0.0
        %1936 = vmatprep.subr.mxu0 0.0
        %1937 = vmatpush1.msra.mxu0 0.0
        %1938 = vmatprep.mubr.f32.mxu0 0.0
        %1939 = vmatmul.mubr.f32.gmra.mrb[0].mxu0 %v1872
        %v1940 = vpop.f32.mrb[0].mxu0
        %v1941 = vadd.f32 %v1869, %v1940
        %v1942 = vpop.f32.mrb[0].mxu0
        %1943 = vdwg.mxu0
        %v1944 = vmul.f32 %v1941, 0.5
        %v1945 = vmul.f32 %v1941, 0.70710677
        %v1946 = vand.u32 2147483647, %v1945
        %v1947 = vmul.f32 %v1946, 0.3275911
        %v1948 = vadd.f32 %v1947, 1.0
        %v1949 = vrcp.pop %v1948
        %v1950 = vmul.f32 1.0, %v1949
        %v1951 = vmul.f32 %v1950, 1.0614054
        %v1952 = vadd.f32 %v1951, -1.4531521
        %v1953 = vmul.f32 %v1952, %v1950
        %v1954 = vadd.f32 %v1953, 1.4214138
        %v1955 = vmul.f32 %v1954, %v1950
        %v1956 = vadd.f32 %v1955, -0.28449672
        %v1957 = vmul.f32 %v1956, %v1950
        %v1958 = vadd.f32 %v1957, 0.2548296
        %v1959 = vmul.f32 %v1958, %v1950
        %v1960 = vsub.f32 0.0, %v1946
        %v1961 = vmul.f32 %v1960, %v1946
        %v1962 = vmul.f32 %v1961, 1.442695
        %v1963 = vpow.pop %v1962
        %v1964 = vmul.f32 %v1959, %v1963
        %v1965 = vsub.f32 1.0, %v1964
        %vm1966 = vcmp.lt.f32.partialorder %v1945, 0.0
        %v1967 = vsub.f32 0.0, %v1965
        %v1968 = vsel %vm1966, %v1967, %v1965
        %v1969 = vadd.f32 %v1968, 1.0
        %v1970 = vmul.f32 %v1944, %v1969
        %v1971 = vld [vmem:[%s12] sm:$0xff]
        %v1972 = vld [vmem:[%s12 + $0x8] sm:$0xff]
        %v1973 = vld [vmem:[%s12 + $0x10] sm:$0xff]
        %v1974 = vld [vmem:[%s12 + $0x18] sm:$0xff]
        %v1975 = vld [vmem:[%s12 + $0x20] sm:$0xff]
        %v1976 = vld [vmem:[%s12 + $0x28] sm:$0xff]
        %v1977 = vld [vmem:[%s12 + $0x30] sm:$0xff]
        %v1978 = vld [vmem:[%s12 + $0x38] sm:$0xff]
        %v1979 = vld [vmem:[%s13] sm:$0x1]
        %v1981 = vlaneseq
        %v1982 = vshrl.u32 %v1981, 7
        %v1983 = vsub.s32 0, %v1982
        %v1984 = vrot.slane %v1979, %v1983
        %vm1986 = vcmask 523264
        %v1988 = vsel %vm1986, %v1970, 0
        %1990 = vmatprep.subr.mxu0 0.0
        %1991 = vmatpush1.msra.mxu0 %v1971
        %1992 = vmatprep.subr.mxu0 0.0
        %1993 = vmatpush1.msra.mxu0 %v1972
        %1994 = vmatprep.subr.mxu0 0.0
        %1995 = vmatpush1.msra.mxu0 %v1973
        %1996 = vmatprep.subr.mxu0 0.0
        %1997 = vmatpush1.msra.mxu0 %v1974
        %1998 = vmatprep.subr.mxu0 0.0
        %1999 = vmatpush1.msra.mxu0 %v1975
        %2000 = vmatprep.subr.mxu0 0.0
        %2001 = vmatpush1.msra.mxu0 %v1976
        %2002 = vmatprep.subr.mxu0 0.0
        %2003 = vmatpush1.msra.mxu0 %v1977
        %2004 = vmatprep.subr.mxu0 0.0
        %2005 = vmatpush1.msra.mxu0 %v1978
        %2006 = vmatprep.subr.mxu0 0.0
        %2007 = vmatpush1.msra.mxu0 0.0
        %2008 = vmatprep.subr.mxu0 0.0
        %2009 = vmatpush1.msra.mxu0 0.0
        %2010 = vmatprep.subr.mxu0 0.0
        %2011 = vmatpush1.msra.mxu0 0.0
        %2012 = vmatprep.subr.mxu0 0.0
        %2013 = vmatpush1.msra.mxu0 0.0
        %2014 = vmatprep.subr.mxu0 0.0
        %2015 = vmatpush1.msra.mxu0 0.0
        %2016 = vmatprep.subr.mxu0 0.0
        %2017 = vmatpush1.msra.mxu0 0.0
        %2018 = vmatprep.subr.mxu0 0.0
        %2019 = vmatpush1.msra.mxu0 0.0
        %2020 = vmatprep.subr.mxu0 0.0
        %2021 = vmatpush1.msra.mxu0 0.0
        %2022 = vmatprep.subr.mxu0 0.0
        %2023 = vmatpush1.msra.mxu0 0.0
        %2024 = vmatprep.subr.mxu0 0.0
        %2025 = vmatpush1.msra.mxu0 0.0
        %2026 = vmatprep.subr.mxu0 0.0
        %2027 = vmatpush1.msra.mxu0 0.0
        %2028 = vmatprep.subr.mxu0 0.0
        %2029 = vmatpush1.msra.mxu0 0.0
        %2030 = vmatprep.subr.mxu0 0.0
        %2031 = vmatpush1.msra.mxu0 0.0
        %2032 = vmatprep.subr.mxu0 0.0
        %2033 = vmatpush1.msra.mxu0 0.0
        %2034 = vmatprep.subr.mxu0 0.0
        %2035 = vmatpush1.msra.mxu0 0.0
        %2036 = vmatprep.subr.mxu0 0.0
        %2037 = vmatpush1.msra.mxu0 0.0
        %2038 = vmatprep.subr.mxu0 0.0
        %2039 = vmatpush1.msra.mxu0 0.0
        %2040 = vmatprep.subr.mxu0 0.0
        %2041 = vmatpush1.msra.mxu0 0.0
        %2042 = vmatprep.subr.mxu0 0.0
        %2043 = vmatpush1.msra.mxu0 0.0
        %2044 = vmatprep.subr.mxu0 0.0
        %2045 = vmatpush1.msra.mxu0 0.0
        %2046 = vmatprep.subr.mxu0 0.0
        %2047 = vmatpush1.msra.mxu0 0.0
        %2048 = vmatprep.subr.mxu0 0.0
        %2049 = vmatpush1.msra.mxu0 0.0
        %2050 = vmatprep.subr.mxu0 0.0
        %2051 = vmatpush1.msra.mxu0 0.0
        %2052 = vmatprep.subr.mxu0 0.0
        %2053 = vmatpush1.msra.mxu0 0.0
        %2054 = vmatprep.mubr.f32.mxu0 0.0
        %2055 = vmatmul.mubr.f32.gmra.mrb[0].mxu0 %v1988
        %v2056 = vpop.f32.mrb[0].mxu0
        %v2057 = vadd.f32 %v1984, %v2056
        %v2058 = vpop.f32.mrb[0].mxu0
        %2059 = vdwg.mxu0
        %v2060 = vadd.f32 %v2057, %v1830
        %2061 = vst.msk [vmem:[%s489] sm:$0xff] %vm502, %v2060
        %s2062 = sand.u32 %s340, 1
        %s2063 = scalar_lea.sflag [#allocation3], %s2062
        %s2064 = sand.u32 %s340, 1
        %s2065 = smul.addr %s2064, 8
        %s2066 = scalar_lea.vmem [#allocation2], %s2065
        %s2067 = sand.u32 %s366, 1
        %s2068 = scalar_lea.sflag [#allocation5], %s2067
        %s2069 = sand.u32 %s366, 1
        %s2070 = smul.addr %s2069, 32
        %s2071 = scalar_lea.vmem [#allocation4], %s2070
        // Predicated region
        $region77: #{linear_block_forward.1} parent=75 // pred_check
          %p2072 = pneg %p350
        $region78: #{linear_block_forward.1} parent=75 // pred_check_branch
          %2074 = sbr.rel (%p2072) target = $region80
        $region79: #{linear_block_forward.1} parent=75 // pred_region
          %s2076 = ssub.s32 128, 128
          %2077 = vsyncadd %s2063, %s2076
          %s2078 = smul.addr %s33, 128
          %s2079 = scalar_lea.hbm %s14, %s2078
          %s2081 = sshll.u32 %s2066, 4
          %s2082 = int_to_ptr.vmem [resolvable:$true] %s2081
          %2084 = dma.vmem_to_hbm [thread:$0]  %s2082, 128, %s2079, %s2063
        $region80: #{linear_block_forward.1} parent=75 // pred_fallthru
          _
        // Predicated region
        $region81: #{linear_block_forward.1} parent=75 // pred_check
          %p2085 = pneg %p376
        $region82: #{linear_block_forward.1} parent=75 // pred_check_branch
          %2087 = sbr.rel (%p2085) target = $region84
        $region83: #{linear_block_forward.1} parent=75 // pred_region
          %s2089 = ssub.s32 512, 512
          %2090 = vsyncadd %s2068, %s2089
          %s2091 = smul.addr %s33, 4
          %s2092 = smul.addr %s2091, 128
          %s2093 = scalar_lea.hbm %s15, %s2092
          %s2094 = sshll.u32 %s2071, 4
          %s2095 = int_to_ptr.vmem [resolvable:$true] %s2094
          %2100 = dma.vmem_to_hbm [thread:$0]  %s2095, 512, %s2093, %s2068, 128, 128, 8
        $region84: #{linear_block_forward.1} parent=75 // pred_fallthru
          _
      $region76: #{linear_block_forward.1} parent=5 // pred_fallthru
        _
      %p2101 = scmp.le.s32.totalorder 2, %s28
      // Predicated region
      $region85: #{linear_block_forward.1} parent=5 // pred_check
        %p2102 = pneg %p2101
      $region86: #{linear_block_forward.1} parent=5 // pred_check_branch
        %2104 = sbr.rel (%p2102) target = $region88
      $region87: #{linear_block_forward.1} parent=5 // pred_region
        %s2105 = ssub.s32 %s28, 2
        // Predicated region
        $region89: #{linear_block_forward.1} parent=87 // pred_check
          %p2106 = pneg %p356
        $region90: #{linear_block_forward.1} parent=87 // pred_check_branch
          %2108 = sbr.rel (%p2106) target = $region92
        $region91: #{linear_block_forward.1} parent=87 // pred_region
          %s2109 = sand.u32 %s341, 1
          %s2110 = scalar_lea.sflag [#allocation3], %s2109
          %s2111 = sand.u32 %s341, 1
          %s2112 = smul.addr %s2111, 8
          %s2113 = scalar_lea.vmem [#allocation2], %s2112
          %2114 = dma.done %s2110, 128
        $region92: #{linear_block_forward.1} parent=87 // pred_fallthru
          _
        // Predicated region
        $region93: #{linear_block_forward.1} parent=87 // pred_check
          %p2115 = pneg %p382
        $region94: #{linear_block_forward.1} parent=87 // pred_check_branch
          %2117 = sbr.rel (%p2115) target = $region96
        $region95: #{linear_block_forward.1} parent=87 // pred_region
          %s2118 = sand.u32 %s367, 1
          %s2119 = scalar_lea.sflag [#allocation5], %s2118
          %s2120 = sand.u32 %s367, 1
          %s2121 = smul.addr %s2120, 32
          %s2122 = scalar_lea.vmem [#allocation4], %s2121
          %2123 = dma.done %s2119, 512
        $region96: #{linear_block_forward.1} parent=87 // pred_fallthru
          _
      $region88: #{linear_block_forward.1} parent=5 // pred_fallthru
        _
    $region6: #{linear_block_forward.1} parent=1 // loop_footer
      %s32 = sadd.s32 1, %s28
    $region7: #{linear_block_forward.1} parent=1 // loop_footer_branch
      %27 = sbr.rel target = $region3
    $region8: #{linear_block_forward.1} parent=1 // loop_exit
      _
    %2124 = vsyncpa [#allocation3], 1
    %s2125 = scalar_lea.sflag [#allocation3], 1
    %2126 = vsyncpa %s2125, 1
    %2127 = vsyncpa [#allocation5], 1
    %s2128 = scalar_lea.sflag [#allocation5], 1
    %2129 = vsyncpa %s2128, 1

</llo_original>
